<compile_context>
chip_gen: v6e
topology: v6e:2x2x1
jax: 0.10.0
libtpu: 0.0.40
codegen_flags: <defaults>
</compile_context>

<pallas_src>
import jax
import jax.numpy as jnp
from jax.experimental import pallas as pl
from jax.experimental.pallas import tpu as pltpu

C = 62       # real channels
CP = 64      # channels padded to a sublane-friendly multiple of 8
L = 5        # sequence length (forced by the matmul in `attention`)
K2 = 5       # attention.conv2 kernel size (== L)
NOUT = 4     # fc output features
BN_EPS = 1e-5


def conv_model_kernel(
    x_ref,      # (L, CP, TB)      activations, batch on lanes
    w1_ref,     # (CP, CP)         conv_model.conv1 (1x1 conv == channel mix)
    wa1_ref,    # (L, L*CP)        attention.conv1 (BN1 folded), block-diagonal
    wa2_ref,    # (CP, L*CP)       attention.conv2 (BN2 folded), full-contraction slab
    wfc_ref,    # (NOUT, L*CP)     fc weight re-indexed to the (l, c) flatten
    bvec_ref,   # (CP, 3)          col0=conv1 bias, col1=folded conv2 bias, col2=fc bias (padded)
    ba1_ref,    # (1, 1) SMEM      folded attention.conv1 + BN1 scalar bias
    out_ref,    # (NOUT, TB)
):
    w1 = w1_ref[...]
    bvec = bvec_ref[...]
    b1 = bvec[:, 0:1]            # (CP, 1)
    ba2 = bvec[:, 1:2]           # (CP, 1)
    bfc = bvec[0:NOUT, 2:3]      # (NOUT, 1)
    ba1 = ba1_ref[0, 0]          # scalar

    # conv1 (kernel_size=1) + ReLU, one (CP,CP)x(CP,TB) MXU matmul per position.
    h_list = []
    for l in range(L):
        h_l = jnp.maximum(
            jnp.dot(w1, x_ref[l], preferred_element_type=jnp.float32) + b1, 0.0)
        h_list.append(h_l)                                   # (CP, TB)
    # Sublane-stack (CP is 8-aligned => layout-compatible concat, no repack).
    hflat = jnp.concatenate(h_list, axis=0)                  # (L*CP, TB)

    # attention.conv1 -> folded BN1 -> ReLU: one block-diagonal matmul, K=L*CP.
    a1 = jnp.maximum(
        jnp.dot(wa1_ref[...], hflat, preferred_element_type=jnp.float32) + ba1,
        0.0)                                                 # (L, TB)

    # attention.conv2 (output length 1 => full contraction over C x K): one
    # matmul with contraction depth K = L*CP = 320, folded BN2 -> ReLU.
    x2 = jnp.maximum(
        jnp.dot(wa2_ref[...], hflat, preferred_element_type=jnp.float32) + ba2,
        0.0)                                                 # (CP, TB)

    # att[l,c,b] = h[l,c,b] * x2[c,b] * a1[l,b]  (per-batch outer product).
    att_list = []
    for l in range(L):
        att_list.append(h_list[l] * x2 * a1[l:l + 1, :])     # (CP, TB)
    attflat = jnp.concatenate(att_list, axis=0)              # (L*CP, TB)

    # fc over the (C*L) flatten, as one K=320 matmul; lane-dense store.
    out_ref[...] = jnp.maximum(
        jnp.dot(wfc_ref[...], attflat, preferred_element_type=jnp.float32) + bfc,
        0.0)                                                 # (NOUT, TB)


def conv_model_forward(x, params, *, tb=None):
    """x: (B, C, L) float32 -> (B, NOUT) float32."""
    (w1, b1, wa1, ba1, g1, be1, rm1, rv1,
     wa2, ba2, g2, be2, rm2, rv2, wfc, bfc) = params
    B = x.shape[0]

    # ---- inference-mode BN folding (plain XLA ops, outside the kernel) ----
    bn1s = g1 / jnp.sqrt(rv1 + BN_EPS)                    # (1,)
    bn1b = be1 - rm1 * bn1s
    wa1f = wa1 * bn1s[:, None]                            # (1, C)
    ba1f = (bn1s * ba1 + bn1b).reshape(1, 1)              # SMEM scalar

    bn2s = g2 / jnp.sqrt(rv2 + BN_EPS)                    # (C,)
    bn2b = be2 - rm2 * bn2s
    wa2f = wa2 * bn2s[:, None, None]                      # (C, C, K2)
    ba2f = bn2s * ba2 + bn2b                              # (C,)

    # ---- pad channels 62 -> 64 and build fused weight slabs ----
    w1p = jnp.zeros((CP, CP), jnp.float32).at[:C, :C].set(w1)
    b1p = jnp.zeros((CP,), jnp.float32).at[:C].set(b1)

    # attention.conv1 as block-diagonal (L, L*CP): row l holds wa1f at cols l*CP+c.
    wa1_blk = jnp.zeros((L, L * CP), jnp.float32)
    for l in range(L):
        wa1_blk = wa1_blk.at[l, l * CP:l * CP + C].set(wa1f[0])

    # attention.conv2 slab (CP, L*CP): col l*CP+c = wa2f[o, c, l].
    wa2_slab = jnp.zeros((CP, L, CP), jnp.float32).at[:C, :, :C].set(
        jnp.transpose(wa2f, (0, 2, 1))).reshape(CP, L * CP)
    ba2p = jnp.zeros((CP,), jnp.float32).at[:C].set(ba2f)

    # fc slab (NOUT, L*CP): col l*CP+c = wfc[o, c*L + l]  (row-major C*L flatten).
    wfc_slab = jnp.zeros((NOUT, L, CP), jnp.float32).at[:, :, :C].set(
        jnp.transpose(wfc.reshape(NOUT, C, L), (0, 2, 1))).reshape(NOUT, L * CP)

    # Per-channel biases consolidated into one small VMEM tile.
    bvec = jnp.stack([b1p, ba2p, jnp.pad(bfc, (0, CP - NOUT))], axis=1)  # (CP, 3)

    # ---- batch tiling: lane-dense 128-multiple tiles, padded batch ----
    # Default tile 1024 fits comfortably in the 32 MiB scoped-VMEM default on
    # v5e/v6e/v7x (x block ~1.25 MiB double-buffered + ~2.5 MiB temporaries).
    # TODO(synk): for very large B on v6e, raise tb to 2048-4096 together with
    # pltpu.CompilerParams(vmem_limit_bytes=...); keep tb <= 2048 on v7x (64 MiB VMEM).
    if tb is None:
        tb = min(1024, max(128, -(-B // 128) * 128))
    BP = -(-B // tb) * tb

    xp = jnp.zeros((BP, CP, L), jnp.float32).at[:B, :C, :].set(x)
    x_lcb = jnp.transpose(xp, (2, 1, 0))                  # (L, CP, BP), batch on lanes

    out = pl.pallas_call(
        conv_model_kernel,
        out_shape=jax.ShapeDtypeStruct((NOUT, BP), jnp.float32),
        grid=(BP // tb,),
        in_specs=[
            pl.BlockSpec((L, CP, tb), lambda i: (0, 0, i)),       # activations, tiled on batch
            pl.BlockSpec((CP, CP), lambda i: (0, 0)),             # resident weights
            pl.BlockSpec((L, L * CP), lambda i: (0, 0)),
            pl.BlockSpec((CP, L * CP), lambda i: (0, 0)),
            pl.BlockSpec((NOUT, L * CP), lambda i: (0, 0)),
            pl.BlockSpec((CP, 3), lambda i: (0, 0)),
            pl.BlockSpec((1, 1), lambda i: (0, 0),
                         memory_space=pltpu.MemorySpace.SMEM),    # scalar bias
        ],
        out_specs=pl.BlockSpec((NOUT, tb), lambda i: (0, i)),
        compiler_params=pltpu.CompilerParams(
            dimension_semantics=("parallel",)),
    )(x_lcb, w1p, wa1_blk, wa2_slab, wfc_slab, bvec, ba1f)
    # TODO(synk): optional bf16 cast of x / weight slabs would halve HBM traffic
    # for large B on v6e/v7x but needs looser tolerances vs the f32 reference.
    return out[:, :B].T                                   # (B, NOUT)


def init_params(key):
    ks = jax.random.split(key, 16)
    s = 0.1
    w1 = s * jax.random.normal(ks[0], (C, C), jnp.float32)         # Conv1d(62,62,1)
    b1 = s * jax.random.normal(ks[1], (C,), jnp.float32)
    wa1 = s * jax.random.normal(ks[2], (1, C), jnp.float32)        # Conv1d(62,1,1)
    ba1 = s * jax.random.normal(ks[3], (1,), jnp.float32)
    wa2 = s * jax.random.normal(ks[4], (C, C, K2), jnp.float32)    # Conv1d(62,62,5)
    ba2 = s * jax.random.normal(ks[5], (C,), jnp.float32)
    wfc = s * jax.random.normal(ks[6], (NOUT, C * L), jnp.float32)  # Linear(310,4)
    bfc = s * jax.random.normal(ks[7], (NOUT,), jnp.float32)
    # BatchNorm parameters / running stats (inference mode).
    # TODO(synk): training-mode BatchNorm (batch statistics) is not implemented;
    # inference-mode (running-stats) semantics are used instead.
    g1 = 1.0 + s * jax.random.normal(ks[8], (1,), jnp.float32)
    be1 = s * jax.random.normal(ks[9], (1,), jnp.float32)
    rm1 = s * jax.random.normal(ks[10], (1,), jnp.float32)
    rv1 = 1.0 + s * jax.random.uniform(ks[11], (1,), jnp.float32)
    g2 = 1.0 + s * jax.random.normal(ks[12], (C,), jnp.float32)
    be2 = s * jax.random.normal(ks[13], (C,), jnp.float32)
    rm2 = s * jax.random.normal(ks[14], (C,), jnp.float32)
    rv2 = 1.0 + s * jax.random.uniform(ks[15], (C,), jnp.float32)
    return [w1, b1, wa1, ba1, g1, be1, rm1, rv1,
            wa2, ba2, g2, be2, rm2, rv2, wfc, bfc]


def reference_forward(x, params):
    """Pure-JAX reference mirroring the PyTorch forward (inference-mode BN)."""
    (w1, b1, wa1, ba1, g1, be1, rm1, rv1,
     wa2, ba2, g2, be2, rm2, rv2, wfc, bfc) = params
    hp = jax.lax.Precision.HIGHEST
    h = jax.nn.relu(jnp.einsum('oi,bil->bol', w1, x, precision=hp)
                    + b1[None, :, None])
    z1 = jnp.einsum('oi,bil->bol', wa1, h, precision=hp) + ba1[None, :, None]
    bn1s = g1 / jnp.sqrt(rv1 + BN_EPS)
    bn1b = be1 - rm1 * bn1s
    a1 = jax.nn.relu(z1 * bn1s[None, :, None] + bn1b[None, :, None])       # (B,1,L)
    z2 = jnp.einsum('oik,bik->bo', wa2, h, precision=hp)[:, :, None] \
        + ba2[None, :, None]
    bn2s = g2 / jnp.sqrt(rv2 + BN_EPS)
    bn2b = be2 - rm2 * bn2s
    x2 = jax.nn.relu(z2 * bn2s[None, :, None] + bn2b[None, :, None])       # (B,C,1)
    att = h * jnp.matmul(x2, a1, precision=hp)                             # (B,C,L)
    fusion = att.reshape(att.shape[0], C * L)
    out = jax.nn.relu(jnp.matmul(fusion, wfc.T, precision=hp) + bfc[None, :])
    return out


if __name__ == "__main__":
    key = jax.random.PRNGKey(0)
    kx, kp = jax.random.split(key)
    x = jax.random.normal(kx, (2, C, L), jnp.float32)   # (batch=2, channels=62, length=5)
    params = init_params(kp)

    out = conv_model_forward(x, params)
    out = jax.block_until_ready(out)

    ref = reference_forward(x, params)
    assert out.shape == (2, NOUT)
    assert bool(jnp.allclose(out, ref, atol=1e-4, rtol=1e-3)), "mismatch vs reference"
    print("KERNEL_OK")
</pallas_src>

<mosaic_0001>
module attributes {stable_mosaic.version = 11 : i64} {
  func.func @conv_model_kernel(%arg0: i32, %arg1: memref<5x64x128xf32, #tpu.memory_space<vmem>>, %arg2: memref<64x64xf32, #tpu.memory_space<vmem>>, %arg3: memref<5x320xf32, #tpu.memory_space<vmem>>, %arg4: memref<64x320xf32, #tpu.memory_space<vmem>>, %arg5: memref<4x320xf32, #tpu.memory_space<vmem>>, %arg6: memref<64x3xf32, #tpu.memory_space<vmem>>, %arg7: memref<1x1xf32, #tpu.memory_space<smem>>, %arg8: memref<4x128xf32, #tpu.memory_space<vmem>>) attributes {dimension_semantics = [#tpu.dimension_semantics<parallel>], iteration_bounds = array<i64: 1>, scalar_prefetch = 0 : i64, scratch_operands = 0 : i64, tpu.core_type = #tpu.core_type<tc>, window_params = [{transform_indices = @transform_0, window_bounds = array<i64: 5, 64, 128>}, {pipeline_mode = #tpu.pipeline_mode<synchronous>, transform_indices = @transform_1, window_bounds = array<i64: 64, 64>}, {pipeline_mode = #tpu.pipeline_mode<synchronous>, transform_indices = @transform_2, window_bounds = array<i64: 5, 320>}, {pipeline_mode = #tpu.pipeline_mode<synchronous>, transform_indices = @transform_3, window_bounds = array<i64: 64, 320>}, {pipeline_mode = #tpu.pipeline_mode<synchronous>, transform_indices = @transform_4, window_bounds = array<i64: 4, 320>}, {pipeline_mode = #tpu.pipeline_mode<synchronous>, transform_indices = @transform_5, window_bounds = array<i64: 64, 3>}, {transform_indices = @transform_6, window_bounds = array<i64: 1, 1>}, {transform_indices = @transform_7, window_bounds = array<i64: 4, 128>}]} {
    %c0 = arith.constant 0 : index
    %c0_0 = arith.constant 0 : index
    %0 = vector.load %arg2[%c0, %c0_0] : memref<64x64xf32, #tpu.memory_space<vmem>>, vector<64x64xf32>
    %c0_1 = arith.constant 0 : index
    %c0_2 = arith.constant 0 : index
    %1 = vector.load %arg6[%c0_1, %c0_2] : memref<64x3xf32, #tpu.memory_space<vmem>>, vector<64x3xf32>
    %2 = vector.extract_strided_slice %1 {offsets = [0, 0], sizes = [64, 1], strides = [1, 1]} : vector<64x3xf32> to vector<64x1xf32>
    %3 = vector.extract_strided_slice %1 {offsets = [0, 1], sizes = [64, 1], strides = [1, 1]} : vector<64x3xf32> to vector<64x1xf32>
    %4 = vector.extract_strided_slice %1 {offsets = [0, 2], sizes = [4, 1], strides = [1, 1]} : vector<64x3xf32> to vector<4x1xf32>
    %c0_3 = arith.constant 0 : index
    %c0_4 = arith.constant 0 : index
    %5 = memref.load %arg7[%c0_3, %c0_4] : memref<1x1xf32, #tpu.memory_space<smem>>
    %c0_5 = arith.constant 0 : index
    %c0_6 = arith.constant 0 : index
    %c0_7 = arith.constant 0 : index
    %6 = vector.load %arg1[%c0_5, %c0_6, %c0_7] : memref<5x64x128xf32, #tpu.memory_space<vmem>>, vector<1x64x128xf32>
    %7 = vector.shape_cast %6 : vector<1x64x128xf32> to vector<64x128xf32>
    %cst = arith.constant dense<0.000000e+00> : vector<64x128xf32>
    %8 = tpu.matmul %0, %7, %cst {dimension_numbers = #tpu.dot_dimension_numbers<[1], [0], [0], [1], [0, 0, 1, 1], [], []>} : vector<64x64xf32>, vector<64x128xf32>, vector<64x128xf32> -> vector<64x128xf32>
    %9 = vector.broadcast %2 : vector<64x1xf32> to vector<64x128xf32>
    %10 = arith.addf %8, %9 : vector<64x128xf32>
    %cst_8 = arith.constant 0.000000e+00 : f32
    %11 = vector.broadcast %cst_8 : f32 to vector<64x128xf32>
    %12 = arith.maximumf %10, %11 : vector<64x128xf32>
    %c1 = arith.constant 1 : index
    %c0_9 = arith.constant 0 : index
    %c0_10 = arith.constant 0 : index
    %13 = vector.load %arg1[%c1, %c0_9, %c0_10] : memref<5x64x128xf32, #tpu.memory_space<vmem>>, vector<1x64x128xf32>
    %14 = vector.shape_cast %13 : vector<1x64x128xf32> to vector<64x128xf32>
    %cst_11 = arith.constant dense<0.000000e+00> : vector<64x128xf32>
    %15 = tpu.matmul %0, %14, %cst_11 {dimension_numbers = #tpu.dot_dimension_numbers<[1], [0], [0], [1], [0, 0, 1, 1], [], []>} : vector<64x64xf32>, vector<64x128xf32>, vector<64x128xf32> -> vector<64x128xf32>
    %16 = vector.broadcast %2 : vector<64x1xf32> to vector<64x128xf32>
    %17 = arith.addf %15, %16 : vector<64x128xf32>
    %cst_12 = arith.constant 0.000000e+00 : f32
    %18 = vector.broadcast %cst_12 : f32 to vector<64x128xf32>
    %19 = arith.maximumf %17, %18 : vector<64x128xf32>
    %c2 = arith.constant 2 : index
    %c0_13 = arith.constant 0 : index
    %c0_14 = arith.constant 0 : index
    %20 = vector.load %arg1[%c2, %c0_13, %c0_14] : memref<5x64x128xf32, #tpu.memory_space<vmem>>, vector<1x64x128xf32>
    %21 = vector.shape_cast %20 : vector<1x64x128xf32> to vector<64x128xf32>
    %cst_15 = arith.constant dense<0.000000e+00> : vector<64x128xf32>
    %22 = tpu.matmul %0, %21, %cst_15 {dimension_numbers = #tpu.dot_dimension_numbers<[1], [0], [0], [1], [0, 0, 1, 1], [], []>} : vector<64x64xf32>, vector<64x128xf32>, vector<64x128xf32> -> vector<64x128xf32>
    %23 = vector.broadcast %2 : vector<64x1xf32> to vector<64x128xf32>
    %24 = arith.addf %22, %23 : vector<64x128xf32>
    %cst_16 = arith.constant 0.000000e+00 : f32
    %25 = vector.broadcast %cst_16 : f32 to vector<64x128xf32>
    %26 = arith.maximumf %24, %25 : vector<64x128xf32>
    %c3 = arith.constant 3 : index
    %c0_17 = arith.constant 0 : index
    %c0_18 = arith.constant 0 : index
    %27 = vector.load %arg1[%c3, %c0_17, %c0_18] : memref<5x64x128xf32, #tpu.memory_space<vmem>>, vector<1x64x128xf32>
    %28 = vector.shape_cast %27 : vector<1x64x128xf32> to vector<64x128xf32>
    %cst_19 = arith.constant dense<0.000000e+00> : vector<64x128xf32>
    %29 = tpu.matmul %0, %28, %cst_19 {dimension_numbers = #tpu.dot_dimension_numbers<[1], [0], [0], [1], [0, 0, 1, 1], [], []>} : vector<64x64xf32>, vector<64x128xf32>, vector<64x128xf32> -> vector<64x128xf32>
    %30 = vector.broadcast %2 : vector<64x1xf32> to vector<64x128xf32>
    %31 = arith.addf %29, %30 : vector<64x128xf32>
    %cst_20 = arith.constant 0.000000e+00 : f32
    %32 = vector.broadcast %cst_20 : f32 to vector<64x128xf32>
    %33 = arith.maximumf %31, %32 : vector<64x128xf32>
    %c4 = arith.constant 4 : index
    %c0_21 = arith.constant 0 : index
    %c0_22 = arith.constant 0 : index
    %34 = vector.load %arg1[%c4, %c0_21, %c0_22] : memref<5x64x128xf32, #tpu.memory_space<vmem>>, vector<1x64x128xf32>
    %35 = vector.shape_cast %34 : vector<1x64x128xf32> to vector<64x128xf32>
    %cst_23 = arith.constant dense<0.000000e+00> : vector<64x128xf32>
    %36 = tpu.matmul %0, %35, %cst_23 {dimension_numbers = #tpu.dot_dimension_numbers<[1], [0], [0], [1], [0, 0, 1, 1], [], []>} : vector<64x64xf32>, vector<64x128xf32>, vector<64x128xf32> -> vector<64x128xf32>
    %37 = vector.broadcast %2 : vector<64x1xf32> to vector<64x128xf32>
    %38 = arith.addf %36, %37 : vector<64x128xf32>
    %cst_24 = arith.constant 0.000000e+00 : f32
    %39 = vector.broadcast %cst_24 : f32 to vector<64x128xf32>
    %40 = arith.maximumf %38, %39 : vector<64x128xf32>
    %41 = tpu.concatenate %12, %19, %26, %33, %40 in 0 : vector<64x128xf32>, vector<64x128xf32>, vector<64x128xf32>, vector<64x128xf32>, vector<64x128xf32> -> vector<320x128xf32>
    %c0_25 = arith.constant 0 : index
    %c0_26 = arith.constant 0 : index
    %42 = vector.load %arg3[%c0_25, %c0_26] : memref<5x320xf32, #tpu.memory_space<vmem>>, vector<5x320xf32>
    %cst_27 = arith.constant dense<0.000000e+00> : vector<5x128xf32>
    %43 = tpu.matmul %42, %41, %cst_27 {dimension_numbers = #tpu.dot_dimension_numbers<[1], [0], [0], [1], [0, 0, 1, 1], [], []>} : vector<5x320xf32>, vector<320x128xf32>, vector<5x128xf32> -> vector<5x128xf32>
    %44 = vector.broadcast %5 : f32 to vector<5x128xf32>
    %45 = arith.addf %43, %44 : vector<5x128xf32>
    %cst_28 = arith.constant 0.000000e+00 : f32
    %46 = vector.broadcast %cst_28 : f32 to vector<5x128xf32>
    %47 = arith.maximumf %45, %46 : vector<5x128xf32>
    %c0_29 = arith.constant 0 : index
    %c0_30 = arith.constant 0 : index
    %48 = vector.load %arg4[%c0_29, %c0_30] : memref<64x320xf32, #tpu.memory_space<vmem>>, vector<64x320xf32>
    %cst_31 = arith.constant dense<0.000000e+00> : vector<64x128xf32>
    %49 = tpu.matmul %48, %41, %cst_31 {dimension_numbers = #tpu.dot_dimension_numbers<[1], [0], [0], [1], [0, 0, 1, 1], [], []>} : vector<64x320xf32>, vector<320x128xf32>, vector<64x128xf32> -> vector<64x128xf32>
    %50 = vector.broadcast %3 : vector<64x1xf32> to vector<64x128xf32>
    %51 = arith.addf %49, %50 : vector<64x128xf32>
    %cst_32 = arith.constant 0.000000e+00 : f32
    %52 = vector.broadcast %cst_32 : f32 to vector<64x128xf32>
    %53 = arith.maximumf %51, %52 : vector<64x128xf32>
    %54 = arith.mulf %12, %53 : vector<64x128xf32>
    %55 = vector.extract_strided_slice %47 {offsets = [0, 0], sizes = [1, 128], strides = [1, 1]} : vector<5x128xf32> to vector<1x128xf32>
    %56 = vector.broadcast %55 : vector<1x128xf32> to vector<64x128xf32>
    %57 = arith.mulf %54, %56 : vector<64x128xf32>
    %58 = arith.mulf %19, %53 : vector<64x128xf32>
    %59 = vector.extract_strided_slice %47 {offsets = [1, 0], sizes = [1, 128], strides = [1, 1]} : vector<5x128xf32> to vector<1x128xf32>
    %60 = vector.broadcast %59 : vector<1x128xf32> to vector<64x128xf32>
    %61 = arith.mulf %58, %60 : vector<64x128xf32>
    %62 = arith.mulf %26, %53 : vector<64x128xf32>
    %63 = vector.extract_strided_slice %47 {offsets = [2, 0], sizes = [1, 128], strides = [1, 1]} : vector<5x128xf32> to vector<1x128xf32>
    %64 = vector.broadcast %63 : vector<1x128xf32> to vector<64x128xf32>
    %65 = arith.mulf %62, %64 : vector<64x128xf32>
    %66 = arith.mulf %33, %53 : vector<64x128xf32>
    %67 = vector.extract_strided_slice %47 {offsets = [3, 0], sizes = [1, 128], strides = [1, 1]} : vector<5x128xf32> to vector<1x128xf32>
    %68 = vector.broadcast %67 : vector<1x128xf32> to vector<64x128xf32>
    %69 = arith.mulf %66, %68 : vector<64x128xf32>
    %70 = arith.mulf %40, %53 : vector<64x128xf32>
    %71 = vector.extract_strided_slice %47 {offsets = [4, 0], sizes = [1, 128], strides = [1, 1]} : vector<5x128xf32> to vector<1x128xf32>
    %72 = vector.broadcast %71 : vector<1x128xf32> to vector<64x128xf32>
    %73 = arith.mulf %70, %72 : vector<64x128xf32>
    %74 = tpu.concatenate %57, %61, %65, %69, %73 in 0 : vector<64x128xf32>, vector<64x128xf32>, vector<64x128xf32>, vector<64x128xf32>, vector<64x128xf32> -> vector<320x128xf32>
    %c0_33 = arith.constant 0 : index
    %c0_34 = arith.constant 0 : index
    %75 = vector.load %arg5[%c0_33, %c0_34] : memref<4x320xf32, #tpu.memory_space<vmem>>, vector<4x320xf32>
    %cst_35 = arith.constant dense<0.000000e+00> : vector<4x128xf32>
    %76 = tpu.matmul %75, %74, %cst_35 {dimension_numbers = #tpu.dot_dimension_numbers<[1], [0], [0], [1], [0, 0, 1, 1], [], []>} : vector<4x320xf32>, vector<320x128xf32>, vector<4x128xf32> -> vector<4x128xf32>
    %77 = vector.broadcast %4 : vector<4x1xf32> to vector<4x128xf32>
    %78 = arith.addf %76, %77 : vector<4x128xf32>
    %cst_36 = arith.constant 0.000000e+00 : f32
    %79 = vector.broadcast %cst_36 : f32 to vector<4x128xf32>
    %80 = arith.maximumf %78, %79 : vector<4x128xf32>
    %c0_37 = arith.constant 0 : index
    %c0_38 = arith.constant 0 : index
    %81 = vector.load %arg8[%c0_37, %c0_38] : memref<4x128xf32, #tpu.memory_space<vmem>>, vector<4x128xf32>
    tpu.vector_store %arg8[%c0_37, %c0_38], %80 {strides = array<i32>} : memref<4x128xf32, #tpu.memory_space<vmem>>, vector<4x128xf32>,
    return
  }
  func.func @transform_0(%arg0: i32) -> (i32, i32, i32) {
    %c0_i32 = arith.constant 0 : i32
    %c0_i32_0 = arith.constant 0 : i32
    %c0_i32_1 = arith.constant 0 : i32
    return %c0_i32, %c0_i32_0, %arg0 : i32, i32, i32
  }
  func.func @transform_1(%arg0: i32) -> (i32, i32) {
    %c0_i32 = arith.constant 0 : i32
    %c0_i32_0 = arith.constant 0 : i32
    %c0_i32_1 = arith.constant 0 : i32
    return %c0_i32, %c0_i32_0 : i32, i32
  }
  func.func @transform_2(%arg0: i32) -> (i32, i32) {
    %c0_i32 = arith.constant 0 : i32
    %c0_i32_0 = arith.constant 0 : i32
    %c0_i32_1 = arith.constant 0 : i32
    return %c0_i32, %c0_i32_0 : i32, i32
  }
  func.func @transform_3(%arg0: i32) -> (i32, i32) {
    %c0_i32 = arith.constant 0 : i32
    %c0_i32_0 = arith.constant 0 : i32
    %c0_i32_1 = arith.constant 0 : i32
    return %c0_i32, %c0_i32_0 : i32, i32
  }
  func.func @transform_4(%arg0: i32) -> (i32, i32) {
    %c0_i32 = arith.constant 0 : i32
    %c0_i32_0 = arith.constant 0 : i32
    %c0_i32_1 = arith.constant 0 : i32
    return %c0_i32, %c0_i32_0 : i32, i32
  }
  func.func @transform_5(%arg0: i32) -> (i32, i32) {
    %c0_i32 = arith.constant 0 : i32
    %c0_i32_0 = arith.constant 0 : i32
    %c0_i32_1 = arith.constant 0 : i32
    return %c0_i32, %c0_i32_0 : i32, i32
  }
  func.func @transform_6(%arg0: i32) -> (i32, i32) {
    %c0_i32 = arith.constant 0 : i32
    %c0_i32_0 = arith.constant 0 : i32
    %c0_i32_1 = arith.constant 0 : i32
    return %c0_i32, %c0_i32_0 : i32, i32
  }
  func.func @transform_7(%arg0: i32) -> (i32, i32) {
    %c0_i32 = arith.constant 0 : i32
    %c0_i32_0 = arith.constant 0 : i32
    return %c0_i32, %arg0 : i32, i32
  }
}

</mosaic_0001>

<llo_original>
// kernel: tpu_custom_call.1
$region0: #{tpu_custom_call.1}
  #allocation0 [shape = 'u32[]', space=smem, size = 0x4, offset = 0x4, fixed_abs, tag = 'smem constant byte address 0x4 - core index']
  #allocation1 [shape = 'u32[144,128]{1,0:T(1,128)}', space=vmem, size = 0x12000, scoped, tag = 'internal scratch']
  #allocation2 [shape = 'f32[1,1]{1,0:T(1,128)S(6)}', space=smem, size = 0x200, scoped, tag = 'scoped memory for tpu_custom_call.1']
  %s0 = inlined_call_operand.hbm [shape: f32[5,64,128], index: 0, kind: input, shape index: {}]
  %s1 = inlined_call_operand.vmem [shape: f32[64,64], index: 1, kind: input, shape index: {}]
  %s2 = inlined_call_operand.hbm [shape: f32[5,320], index: 2, kind: input, shape index: {}]
  %s3 = inlined_call_operand.hbm [shape: f32[64,320], index: 3, kind: input, shape index: {}]
  %s4 = inlined_call_operand.vmem [shape: f32[4,320], index: 4, kind: input, shape index: {}]
  %s5 = inlined_call_operand.vmem [shape: f32[64,3], index: 5, kind: input, shape index: {}]
  %s6 = inlined_call_operand.<no memory space> [shape: f32[1,1], index: 6, kind: input, shape index: {}]
  %s7 = inlined_call_operand.hbm [shape: f32[4,128], index: 7, kind: output, shape index: {}]
  %s8 = sld [smem:[#allocation0]]
  $region50: #{tpu_custom_call.1} parent=0
    _
  %s10 = ssub.s32 1, %s8
  %s11 = scalar_select 0, %s10, %s8
  %12 = sst [smem:[#allocation2]] %s6
  $region1: #{tpu_custom_call.1} parent=0
    #allocation3 [shape = 'u8[163840]{0}', space=vmem, size = 0x28000, scoped, tag = 'input window, operand 0, single buffered']
    #allocation4 [shape = 's32[1]{0}', space=sflag, size = 0x4, scoped, tag = 'scoped memory for tpu_custom_call.1']
    #allocation5 [shape = 's32[1]{0}', space=sflag, size = 0x4, scoped, tag = 'scoped memory for tpu_custom_call.1']
    #allocation6 [shape = 'u8[12288]{0}', space=vmem, size = 0x3000, scoped, tag = 'input window, operand 2, single buffered']
    #allocation7 [shape = 's32[1]{0}', space=sflag, size = 0x4, scoped, tag = 'scoped memory for tpu_custom_call.1']
    #allocation8 [shape = 'u8[98304]{0}', space=vmem, size = 0x18000, scoped, tag = 'input window, operand 3, single buffered']
    #allocation9 [shape = 'u8[2048]{0}', space=vmem, size = 0x800, scoped, tag = 'output window, operand 0, single buffered']
    %13 = vsyncpa [#allocation4], 0
    %14 = vsyncpa [#allocation7], 0
    %15 = vsyncpa [#allocation5], 0
    // Predicated region
    $region2: #{tpu_custom_call.1} parent=1 // pred_check
      _
    $region3: #{tpu_custom_call.1} parent=1 // pred_check_branch
      %17 = sbr.rel (0) target = $region5
    $region4: #{tpu_custom_call.1} parent=1 // pred_region
      %s19 = ssub.s32 5120, 5120
      %20 = vsyncadd [#allocation4], %s19
      %s21 = sshll.u32 [#allocation3], 4
      %s22 = int_to_ptr.vmem [resolvable:$true] %s21
      %27 = dma.hbm_to_vmem [thread:$0]  %s0, 5120, %s22, [#allocation4], 128, 128, 8
    $region5: #{tpu_custom_call.1} parent=1 // pred_fallthru
      _
    // Predicated region
    $region6: #{tpu_custom_call.1} parent=1 // pred_check
      _
    $region7: #{tpu_custom_call.1} parent=1 // pred_check_branch
      %29 = sbr.rel (0) target = $region9
    $region8: #{tpu_custom_call.1} parent=1 // pred_region
      _
    $region9: #{tpu_custom_call.1} parent=1 // pred_fallthru
      _
    // Predicated region
    $region10: #{tpu_custom_call.1} parent=1 // pred_check
      _
    $region11: #{tpu_custom_call.1} parent=1 // pred_check_branch
      %31 = sbr.rel (0) target = $region13
    $region12: #{tpu_custom_call.1} parent=1 // pred_region
      %s33 = ssub.s32 384, 384
      %34 = vsyncadd [#allocation7], %s33
      %s36 = sshll.u32 [#allocation6], 4
      %s37 = int_to_ptr.vmem [resolvable:$true] %s36
      %39 = dma.hbm_to_vmem [thread:$0]  %s2, 384, %s37, [#allocation7]
    $region13: #{tpu_custom_call.1} parent=1 // pred_fallthru
      _
    // Predicated region
    $region14: #{tpu_custom_call.1} parent=1 // pred_check
      _
    $region15: #{tpu_custom_call.1} parent=1 // pred_check_branch
      %41 = sbr.rel (0) target = $region17
    $region16: #{tpu_custom_call.1} parent=1 // pred_region
      %s43 = ssub.s32 3072, 3072
      %44 = vsyncadd [#allocation7], %s43
      %s45 = sshll.u32 [#allocation8], 4
      %s46 = int_to_ptr.vmem [resolvable:$true] %s45
      %51 = dma.hbm_to_vmem [thread:$0]  %s3, 3072, %s46, [#allocation7], 384, 384, 24
    $region17: #{tpu_custom_call.1} parent=1 // pred_fallthru
      _
    // Predicated region
    $region18: #{tpu_custom_call.1} parent=1 // pred_check
      _
    $region19: #{tpu_custom_call.1} parent=1 // pred_check_branch
      %53 = sbr.rel (0) target = $region21
    $region20: #{tpu_custom_call.1} parent=1 // pred_region
      _
    $region21: #{tpu_custom_call.1} parent=1 // pred_fallthru
      _
    // Predicated region
    $region22: #{tpu_custom_call.1} parent=1 // pred_check
      _
    $region23: #{tpu_custom_call.1} parent=1 // pred_check_branch
      %55 = sbr.rel (0) target = $region25
    $region24: #{tpu_custom_call.1} parent=1 // pred_region
      _
    $region25: #{tpu_custom_call.1} parent=1 // pred_fallthru
      _
    // Predicated region
    $region26: #{tpu_custom_call.1} parent=1 // pred_check
      _
    $region27: #{tpu_custom_call.1} parent=1 // pred_check_branch
      %57 = sbr.rel (0) target = $region29
    $region28: #{tpu_custom_call.1} parent=1 // pred_region
      _
    $region29: #{tpu_custom_call.1} parent=1 // pred_fallthru
      _
    // Predicated region
    $region30: #{tpu_custom_call.1} parent=1 // pred_check
      _
    $region31: #{tpu_custom_call.1} parent=1 // pred_check_branch
      %59 = sbr.rel (0) target = $region33
    $region32: #{tpu_custom_call.1} parent=1 // pred_region
      %60 = dma.done [#allocation4], 5120
    $region33: #{tpu_custom_call.1} parent=1 // pred_fallthru
      _
    // Predicated region
    $region34: #{tpu_custom_call.1} parent=1 // pred_check
      _
    $region35: #{tpu_custom_call.1} parent=1 // pred_check_branch
      %62 = sbr.rel (0) target = $region37
    $region36: #{tpu_custom_call.1} parent=1 // pred_region
      %63 = dma.done [#allocation7], 384
    $region37: #{tpu_custom_call.1} parent=1 // pred_fallthru
      _
    // Predicated region
    $region38: #{tpu_custom_call.1} parent=1 // pred_check
      _
    $region39: #{tpu_custom_call.1} parent=1 // pred_check_branch
      %65 = sbr.rel (0) target = $region41
    $region40: #{tpu_custom_call.1} parent=1 // pred_region
      %66 = dma.done [#allocation7], 3072
    $region41: #{tpu_custom_call.1} parent=1 // pred_fallthru
      _
    %v67 = vld [vmem:[%s1] sm:$0xff]
    %v68 = vld [vmem:[%s1 + $0x8] sm:$0xff]
    %v69 = vld [vmem:[%s1 + $0x10] sm:$0xff]
    %v70 = vld [vmem:[%s1 + $0x18] sm:$0xff]
    %v71 = vld [vmem:[%s1 + $0x20] sm:$0xff]
    %v72 = vld [vmem:[%s1 + $0x28] sm:$0xff]
    %v73 = vld [vmem:[%s1 + $0x30] sm:$0xff]
    %v74 = vld [vmem:[%s1 + $0x38] sm:$0xff]
    %v75 = vld [vmem:[%s5] sm:$0xff]
    %v76 = vld [vmem:[%s5 + $0x8] sm:$0xff]
    %v77 = vld [vmem:[%s5 + $0x10] sm:$0xff]
    %v78 = vld [vmem:[%s5 + $0x18] sm:$0xff]
    %v79 = vld [vmem:[%s5 + $0x20] sm:$0xff]
    %v80 = vld [vmem:[%s5 + $0x28] sm:$0xff]
    %v81 = vld [vmem:[%s5 + $0x30] sm:$0xff]
    %v82 = vld [vmem:[%s5 + $0x38] sm:$0xff]
    %s83 = sld [smem:[#allocation2]]
    %v84 = vld [vmem:[#allocation3] sm:$0xff]
    %v85 = vld [vmem:[#allocation3 + $0x8] sm:$0xff]
    %v86 = vld [vmem:[#allocation3 + $0x10] sm:$0xff]
    %v87 = vld [vmem:[#allocation3 + $0x18] sm:$0xff]
    %v88 = vld [vmem:[#allocation3 + $0x20] sm:$0xff]
    %v89 = vld [vmem:[#allocation3 + $0x28] sm:$0xff]
    %v90 = vld [vmem:[#allocation3 + $0x30] sm:$0xff]
    %v91 = vld [vmem:[#allocation3 + $0x38] sm:$0xff]
    %93 = vset.pattern.permute.xlu0 0
    %94 = vperm.xlu0 %93, %v75
    %v95 = vpop.permute.xlu0 %94
    %98 = vset.pattern.permute.xlu0 0
    %99 = vperm.xlu0 %98, %v76
    %v100 = vpop.permute.xlu0 %99
    %103 = vset.pattern.permute.xlu0 0
    %104 = vperm.xlu0 %103, %v77
    %v105 = vpop.permute.xlu0 %104
    %108 = vset.pattern.permute.xlu0 0
    %109 = vperm.xlu0 %108, %v78
    %v110 = vpop.permute.xlu0 %109
    %113 = vset.pattern.permute.xlu0 0
    %114 = vperm.xlu0 %113, %v79
    %v115 = vpop.permute.xlu0 %114
    %118 = vset.pattern.permute.xlu0 0
    %119 = vperm.xlu0 %118, %v80
    %v120 = vpop.permute.xlu0 %119
    %123 = vset.pattern.permute.xlu0 0
    %124 = vperm.xlu0 %123, %v81
    %v125 = vpop.permute.xlu0 %124
    %128 = vset.pattern.permute.xlu0 0
    %129 = vperm.xlu0 %128, %v82
    %v130 = vpop.permute.xlu0 %129
    %vm132 = vcmask 523264
    %v134 = vsel %vm132, %v67, 0
    %v137 = vsel %vm132, %v68, 0
    %v140 = vsel %vm132, %v69, 0
    %v143 = vsel %vm132, %v70, 0
    %v146 = vsel %vm132, %v71, 0
    %v149 = vsel %vm132, %v72, 0
    %v152 = vsel %vm132, %v73, 0
    %v155 = vsel %vm132, %v74, 0
    %157 = vmatprep.subr.mxu0 0.0
    %158 = vmatpush1.msra.mxu0 0.0
    %159 = vmatprep.subr.mxu0 0.0
    %160 = vmatpush1.msra.mxu0 0.0
    %161 = vmatprep.subr.mxu0 0.0
    %162 = vmatpush1.msra.mxu0 0.0
    %163 = vmatprep.subr.mxu0 0.0
    %164 = vmatpush1.msra.mxu0 0.0
    %165 = vmatprep.subr.mxu0 0.0
    %166 = vmatpush1.msra.mxu0 0.0
    %167 = vmatprep.subr.mxu0 0.0
    %168 = vmatpush1.msra.mxu0 0.0
    %169 = vmatprep.subr.mxu0 0.0
    %170 = vmatpush1.msra.mxu0 0.0
    %171 = vmatprep.subr.mxu0 0.0
    %172 = vmatpush1.msra.mxu0 0.0
    %173 = vmatprep.subr.mxu0 0.0
    %174 = vmatpush1.msra.mxu0 %v91
    %175 = vmatprep.subr.mxu0 0.0
    %176 = vmatpush1.msra.mxu0 %v90
    %177 = vmatprep.subr.mxu0 0.0
    %178 = vmatpush1.msra.mxu0 %v89
    %179 = vmatprep.subr.mxu0 0.0
    %180 = vmatpush1.msra.mxu0 %v88
    %181 = vmatprep.subr.mxu0 0.0
    %182 = vmatpush1.msra.mxu0 %v87
    %183 = vmatprep.subr.mxu0 0.0
    %184 = vmatpush1.msra.mxu0 %v86
    %185 = vmatprep.subr.mxu0 0.0
    %186 = vmatpush1.msra.mxu0 %v85
    %187 = vmatprep.subr.mxu0 0.0
    %188 = vmatpush1.msra.mxu0 %v84
    %189 = vmatprep.subr.mxu0 0.0
    %190 = vmatpush2.msra.mxu0 0.0
    %191 = vmatprep.subr.mxu0 0.0
    %192 = vmatpush2.msra.mxu0 0.0
    %193 = vmatprep.subr.mxu0 0.0
    %194 = vmatpush2.msra.mxu0 0.0
    %195 = vmatprep.subr.mxu0 0.0
    %196 = vmatpush2.msra.mxu0 0.0
    %197 = vmatprep.subr.mxu0 0.0
    %198 = vmatpush2.msra.mxu0 0.0
    %199 = vmatprep.subr.mxu0 0.0
    %200 = vmatpush2.msra.mxu0 0.0
    %201 = vmatprep.subr.mxu0 0.0
    %202 = vmatpush2.msra.mxu0 0.0
    %203 = vmatprep.subr.mxu0 0.0
    %204 = vmatpush2.msra.mxu0 0.0
    %205 = vmatprep.subr.mxu0 0.0
    %206 = vmatpush2.msra.mxu0 0.0
    %207 = vmatprep.subr.mxu0 0.0
    %208 = vmatpush2.msra.mxu0 0.0
    %209 = vmatprep.subr.mxu0 0.0
    %210 = vmatpush2.msra.mxu0 0.0
    %211 = vmatprep.subr.mxu0 0.0
    %212 = vmatpush2.msra.mxu0 0.0
    %213 = vmatprep.subr.mxu0 0.0
    %214 = vmatpush2.msra.mxu0 0.0
    %215 = vmatprep.subr.mxu0 0.0
    %216 = vmatpush2.msra.mxu0 0.0
    %217 = vmatprep.subr.mxu0 0.0
    %218 = vmatpush2.msra.mxu0 0.0
    %219 = vmatprep.subr.mxu0 0.0
    %220 = vmatpush2.msra.mxu0 0.0
    %221 = vmatprep.mubr.f32.mxu0 0.0
    %222 = vmatmul.mubr.f32.gmra.mxu0 %v134
    %v223 = vpop.f32.mrf.mxu0
    %v224 = vadd.f32 %v95, %v223
    %v225 = vpop.f32.mrf.mxu0
    %226 = vmatprep.mubr.f32.mxu0 0.0
    %227 = vmatmul.mubr.f32.gmra.mxu0 %v137
    %v228 = vpop.f32.mrf.mxu0
    %v229 = vadd.f32 %v100, %v228
    %v230 = vpop.f32.mrf.mxu0
    %231 = vmatprep.mubr.f32.mxu0 0.0
    %232 = vmatmul.mubr.f32.gmra.mxu0 %v140
    %v233 = vpop.f32.mrf.mxu0
    %v234 = vadd.f32 %v105, %v233
    %v235 = vpop.f32.mrf.mxu0
    %236 = vmatprep.mubr.f32.mxu0 0.0
    %237 = vmatmul.mubr.f32.gmra.mxu0 %v143
    %v238 = vpop.f32.mrf.mxu0
    %v239 = vadd.f32 %v110, %v238
    %v240 = vpop.f32.mrf.mxu0
    %241 = vmatprep.mubr.f32.mxu0 0.0
    %242 = vmatmul.mubr.f32.gmra.mxu0 %v146
    %v243 = vpop.f32.mrf.mxu0
    %v244 = vadd.f32 %v115, %v243
    %v245 = vpop.f32.mrf.mxu0
    %246 = vmatprep.mubr.f32.mxu0 0.0
    %247 = vmatmul.mubr.f32.gmra.mxu0 %v149
    %v248 = vpop.f32.mrf.mxu0
    %v249 = vadd.f32 %v120, %v248
    %v250 = vpop.f32.mrf.mxu0
    %251 = vmatprep.mubr.f32.mxu0 0.0
    %252 = vmatmul.mubr.f32.gmra.mxu0 %v152
    %v253 = vpop.f32.mrf.mxu0
    %v254 = vadd.f32 %v125, %v253
    %v255 = vpop.f32.mrf.mxu0
    %256 = vmatprep.mubr.f32.mxu0 0.0
    %257 = vmatmul.mubr.f32.gmra.mxu0 %v155
    %v258 = vpop.f32.mrf.mxu0
    %v259 = vadd.f32 %v130, %v258
    %v260 = vpop.f32.mrf.mxu0
    %261 = vdwg.mxu0
    %v262 = vmax.f32 %v224, 0.0
    %v263 = vmax.f32 %v229, 0.0
    %v264 = vmax.f32 %v234, 0.0
    %v265 = vmax.f32 %v239, 0.0
    %v266 = vmax.f32 %v244, 0.0
    %v267 = vmax.f32 %v249, 0.0
    %v268 = vmax.f32 %v254, 0.0
    %v269 = vmax.f32 %v259, 0.0
    %s270 = scalar_lea.vmem [#allocation3], 64
    %v271 = vld [vmem:[%s270] sm:$0xff]
    %v272 = vld [vmem:[%s270 + $0x8] sm:$0xff]
    %v273 = vld [vmem:[%s270 + $0x10] sm:$0xff]
    %v274 = vld [vmem:[%s270 + $0x18] sm:$0xff]
    %v275 = vld [vmem:[%s270 + $0x20] sm:$0xff]
    %v276 = vld [vmem:[%s270 + $0x28] sm:$0xff]
    %v277 = vld [vmem:[%s270 + $0x30] sm:$0xff]
    %v278 = vld [vmem:[%s270 + $0x38] sm:$0xff]
    %279 = vmatprep.subr.mxu0 0.0
    %280 = vmatpush1.msra.mxu0 0.0
    %281 = vmatprep.subr.mxu0 0.0
    %282 = vmatpush1.msra.mxu0 0.0
    %283 = vmatprep.subr.mxu0 0.0
    %284 = vmatpush1.msra.mxu0 0.0
    %285 = vmatprep.subr.mxu0 0.0
    %286 = vmatpush1.msra.mxu0 0.0
    %287 = vmatprep.subr.mxu0 0.0
    %288 = vmatpush1.msra.mxu0 0.0
    %289 = vmatprep.subr.mxu0 0.0
    %290 = vmatpush1.msra.mxu0 0.0
    %291 = vmatprep.subr.mxu0 0.0
    %292 = vmatpush1.msra.mxu0 0.0
    %293 = vmatprep.subr.mxu0 0.0
    %294 = vmatpush1.msra.mxu0 0.0
    %295 = vmatprep.subr.mxu0 0.0
    %296 = vmatpush1.msra.mxu0 %v278
    %297 = vmatprep.subr.mxu0 0.0
    %298 = vmatpush1.msra.mxu0 %v277
    %299 = vmatprep.subr.mxu0 0.0
    %300 = vmatpush1.msra.mxu0 %v276
    %301 = vmatprep.subr.mxu0 0.0
    %302 = vmatpush1.msra.mxu0 %v275
    %303 = vmatprep.subr.mxu0 0.0
    %304 = vmatpush1.msra.mxu0 %v274
    %305 = vmatprep.subr.mxu0 0.0
    %306 = vmatpush1.msra.mxu0 %v273
    %307 = vmatprep.subr.mxu0 0.0
    %308 = vmatpush1.msra.mxu0 %v272
    %309 = vmatprep.subr.mxu0 0.0
    %310 = vmatpush1.msra.mxu0 %v271
    %311 = vmatprep.subr.mxu0 0.0
    %312 = vmatpush2.msra.mxu0 0.0
    %313 = vmatprep.subr.mxu0 0.0
    %314 = vmatpush2.msra.mxu0 0.0
    %315 = vmatprep.subr.mxu0 0.0
    %316 = vmatpush2.msra.mxu0 0.0
    %317 = vmatprep.subr.mxu0 0.0
    %318 = vmatpush2.msra.mxu0 0.0
    %319 = vmatprep.subr.mxu0 0.0
    %320 = vmatpush2.msra.mxu0 0.0
    %321 = vmatprep.subr.mxu0 0.0
    %322 = vmatpush2.msra.mxu0 0.0
    %323 = vmatprep.subr.mxu0 0.0
    %324 = vmatpush2.msra.mxu0 0.0
    %325 = vmatprep.subr.mxu0 0.0
    %326 = vmatpush2.msra.mxu0 0.0
    %327 = vmatprep.subr.mxu0 0.0
    %328 = vmatpush2.msra.mxu0 0.0
    %329 = vmatprep.subr.mxu0 0.0
    %330 = vmatpush2.msra.mxu0 0.0
    %331 = vmatprep.subr.mxu0 0.0
    %332 = vmatpush2.msra.mxu0 0.0
    %333 = vmatprep.subr.mxu0 0.0
    %334 = vmatpush2.msra.mxu0 0.0
    %335 = vmatprep.subr.mxu0 0.0
    %336 = vmatpush2.msra.mxu0 0.0
    %337 = vmatprep.subr.mxu0 0.0
    %338 = vmatpush2.msra.mxu0 0.0
    %339 = vmatprep.subr.mxu0 0.0
    %340 = vmatpush2.msra.mxu0 0.0
    %341 = vmatprep.subr.mxu0 0.0
    %342 = vmatpush2.msra.mxu0 0.0
    %343 = vmatprep.mubr.f32.mxu0 0.0
    %344 = vmatmul.mubr.f32.gmra.mxu0 %v134
    %v345 = vpop.f32.mrf.mxu0
    %v346 = vadd.f32 %v95, %v345
    %v347 = vpop.f32.mrf.mxu0
    %348 = vmatprep.mubr.f32.mxu0 0.0
    %349 = vmatmul.mubr.f32.gmra.mxu0 %v137
    %v350 = vpop.f32.mrf.mxu0
    %v351 = vadd.f32 %v100, %v350
    %v352 = vpop.f32.mrf.mxu0
    %353 = vmatprep.mubr.f32.mxu0 0.0
    %354 = vmatmul.mubr.f32.gmra.mxu0 %v140
    %v355 = vpop.f32.mrf.mxu0
    %v356 = vadd.f32 %v105, %v355
    %v357 = vpop.f32.mrf.mxu0
    %358 = vmatprep.mubr.f32.mxu0 0.0
    %359 = vmatmul.mubr.f32.gmra.mxu0 %v143
    %v360 = vpop.f32.mrf.mxu0
    %v361 = vadd.f32 %v110, %v360
    %v362 = vpop.f32.mrf.mxu0
    %363 = vmatprep.mubr.f32.mxu0 0.0
    %364 = vmatmul.mubr.f32.gmra.mxu0 %v146
    %v365 = vpop.f32.mrf.mxu0
    %v366 = vadd.f32 %v115, %v365
    %v367 = vpop.f32.mrf.mxu0
    %368 = vmatprep.mubr.f32.mxu0 0.0
    %369 = vmatmul.mubr.f32.gmra.mxu0 %v149
    %v370 = vpop.f32.mrf.mxu0
    %v371 = vadd.f32 %v120, %v370
    %v372 = vpop.f32.mrf.mxu0
    %373 = vmatprep.mubr.f32.mxu0 0.0
    %374 = vmatmul.mubr.f32.gmra.mxu0 %v152
    %v375 = vpop.f32.mrf.mxu0
    %v376 = vadd.f32 %v125, %v375
    %v377 = vpop.f32.mrf.mxu0
    %378 = vmatprep.mubr.f32.mxu0 0.0
    %379 = vmatmul.mubr.f32.gmra.mxu0 %v155
    %v380 = vpop.f32.mrf.mxu0
    %v381 = vadd.f32 %v130, %v380
    %v382 = vpop.f32.mrf.mxu0
    %383 = vdwg.mxu0
    %v384 = vmax.f32 %v346, 0.0
    %v385 = vmax.f32 %v351, 0.0
    %v386 = vmax.f32 %v356, 0.0
    %v387 = vmax.f32 %v361, 0.0
    %v388 = vmax.f32 %v366, 0.0
    %v389 = vmax.f32 %v371, 0.0
    %v390 = vmax.f32 %v376, 0.0
    %v391 = vmax.f32 %v381, 0.0
    %s392 = scalar_lea.vmem [#allocation3], 128
    %v393 = vld [vmem:[%s392] sm:$0xff]
    %v394 = vld [vmem:[%s392 + $0x8] sm:$0xff]
    %v395 = vld [vmem:[%s392 + $0x10] sm:$0xff]
    %v396 = vld [vmem:[%s392 + $0x18] sm:$0xff]
    %v397 = vld [vmem:[%s392 + $0x20] sm:$0xff]
    %v398 = vld [vmem:[%s392 + $0x28] sm:$0xff]
    %v399 = vld [vmem:[%s392 + $0x30] sm:$0xff]
    %v400 = vld [vmem:[%s392 + $0x38] sm:$0xff]
    %401 = vmatprep.subr.mxu0 0.0
    %402 = vmatpush1.msra.mxu0 0.0
    %403 = vmatprep.subr.mxu0 0.0
    %404 = vmatpush1.msra.mxu0 0.0
    %405 = vmatprep.subr.mxu0 0.0
    %406 = vmatpush1.msra.mxu0 0.0
    %407 = vmatprep.subr.mxu0 0.0
    %408 = vmatpush1.msra.mxu0 0.0
    %409 = vmatprep.subr.mxu0 0.0
    %410 = vmatpush1.msra.mxu0 0.0
    %411 = vmatprep.subr.mxu0 0.0
    %412 = vmatpush1.msra.mxu0 0.0
    %413 = vmatprep.subr.mxu0 0.0
    %414 = vmatpush1.msra.mxu0 0.0
    %415 = vmatprep.subr.mxu0 0.0
    %416 = vmatpush1.msra.mxu0 0.0
    %417 = vmatprep.subr.mxu0 0.0
    %418 = vmatpush1.msra.mxu0 %v400
    %419 = vmatprep.subr.mxu0 0.0
    %420 = vmatpush1.msra.mxu0 %v399
    %421 = vmatprep.subr.mxu0 0.0
    %422 = vmatpush1.msra.mxu0 %v398
    %423 = vmatprep.subr.mxu0 0.0
    %424 = vmatpush1.msra.mxu0 %v397
    %425 = vmatprep.subr.mxu0 0.0
    %426 = vmatpush1.msra.mxu0 %v396
    %427 = vmatprep.subr.mxu0 0.0
    %428 = vmatpush1.msra.mxu0 %v395
    %429 = vmatprep.subr.mxu0 0.0
    %430 = vmatpush1.msra.mxu0 %v394
    %431 = vmatprep.subr.mxu0 0.0
    %432 = vmatpush1.msra.mxu0 %v393
    %433 = vmatprep.subr.mxu0 0.0
    %434 = vmatpush2.msra.mxu0 0.0
    %435 = vmatprep.subr.mxu0 0.0
    %436 = vmatpush2.msra.mxu0 0.0
    %437 = vmatprep.subr.mxu0 0.0
    %438 = vmatpush2.msra.mxu0 0.0
    %439 = vmatprep.subr.mxu0 0.0
    %440 = vmatpush2.msra.mxu0 0.0
    %441 = vmatprep.subr.mxu0 0.0
    %442 = vmatpush2.msra.mxu0 0.0
    %443 = vmatprep.subr.mxu0 0.0
    %444 = vmatpush2.msra.mxu0 0.0
    %445 = vmatprep.subr.mxu0 0.0
    %446 = vmatpush2.msra.mxu0 0.0
    %447 = vmatprep.subr.mxu0 0.0
    %448 = vmatpush2.msra.mxu0 0.0
    %449 = vmatprep.subr.mxu0 0.0
    %450 = vmatpush2.msra.mxu0 0.0
    %451 = vmatprep.subr.mxu0 0.0
    %452 = vmatpush2.msra.mxu0 0.0
    %453 = vmatprep.subr.mxu0 0.0
    %454 = vmatpush2.msra.mxu0 0.0
    %455 = vmatprep.subr.mxu0 0.0
    %456 = vmatpush2.msra.mxu0 0.0
    %457 = vmatprep.subr.mxu0 0.0
    %458 = vmatpush2.msra.mxu0 0.0
    %459 = vmatprep.subr.mxu0 0.0
    %460 = vmatpush2.msra.mxu0 0.0
    %461 = vmatprep.subr.mxu0 0.0
    %462 = vmatpush2.msra.mxu0 0.0
    %463 = vmatprep.subr.mxu0 0.0
    %464 = vmatpush2.msra.mxu0 0.0
    %465 = vmatprep.mubr.f32.mxu0 0.0
    %466 = vmatmul.mubr.f32.gmra.mxu0 %v134
    %v467 = vpop.f32.mrf.mxu0
    %v468 = vadd.f32 %v95, %v467
    %v469 = vpop.f32.mrf.mxu0
    %470 = vmatprep.mubr.f32.mxu0 0.0
    %471 = vmatmul.mubr.f32.gmra.mxu0 %v137
    %v472 = vpop.f32.mrf.mxu0
    %v473 = vadd.f32 %v100, %v472
    %v474 = vpop.f32.mrf.mxu0
    %475 = vmatprep.mubr.f32.mxu0 0.0
    %476 = vmatmul.mubr.f32.gmra.mxu0 %v140
    %v477 = vpop.f32.mrf.mxu0
    %v478 = vadd.f32 %v105, %v477
    %v479 = vpop.f32.mrf.mxu0
    %480 = vmatprep.mubr.f32.mxu0 0.0
    %481 = vmatmul.mubr.f32.gmra.mxu0 %v143
    %v482 = vpop.f32.mrf.mxu0
    %v483 = vadd.f32 %v110, %v482
    %v484 = vpop.f32.mrf.mxu0
    %485 = vmatprep.mubr.f32.mxu0 0.0
    %486 = vmatmul.mubr.f32.gmra.mxu0 %v146
    %v487 = vpop.f32.mrf.mxu0
    %v488 = vadd.f32 %v115, %v487
    %v489 = vpop.f32.mrf.mxu0
    %490 = vmatprep.mubr.f32.mxu0 0.0
    %491 = vmatmul.mubr.f32.gmra.mxu0 %v149
    %v492 = vpop.f32.mrf.mxu0
    %v493 = vadd.f32 %v120, %v492
    %v494 = vpop.f32.mrf.mxu0
    %495 = vmatprep.mubr.f32.mxu0 0.0
    %496 = vmatmul.mubr.f32.gmra.mxu0 %v152
    %v497 = vpop.f32.mrf.mxu0
    %v498 = vadd.f32 %v125, %v497
    %v499 = vpop.f32.mrf.mxu0
    %500 = vmatprep.mubr.f32.mxu0 0.0
    %501 = vmatmul.mubr.f32.gmra.mxu0 %v155
    %v502 = vpop.f32.mrf.mxu0
    %v503 = vadd.f32 %v130, %v502
    %v504 = vpop.f32.mrf.mxu0
    %505 = vdwg.mxu0
    %v506 = vmax.f32 %v468, 0.0
    %v507 = vmax.f32 %v473, 0.0
    %v508 = vmax.f32 %v478, 0.0
    %v509 = vmax.f32 %v483, 0.0
    %v510 = vmax.f32 %v488, 0.0
    %v511 = vmax.f32 %v493, 0.0
    %v512 = vmax.f32 %v498, 0.0
    %v513 = vmax.f32 %v503, 0.0
    %s514 = scalar_lea.vmem [#allocation3], 192
    %v515 = vld [vmem:[%s514] sm:$0xff]
    %v516 = vld [vmem:[%s514 + $0x8] sm:$0xff]
    %v517 = vld [vmem:[%s514 + $0x10] sm:$0xff]
    %v518 = vld [vmem:[%s514 + $0x18] sm:$0xff]
    %v519 = vld [vmem:[%s514 + $0x20] sm:$0xff]
    %v520 = vld [vmem:[%s514 + $0x28] sm:$0xff]
    %v521 = vld [vmem:[%s514 + $0x30] sm:$0xff]
    %v522 = vld [vmem:[%s514 + $0x38] sm:$0xff]
    %523 = vmatprep.subr.mxu0 0.0
    %524 = vmatpush1.msra.mxu0 0.0
    %525 = vmatprep.subr.mxu0 0.0
    %526 = vmatpush1.msra.mxu0 0.0
    %527 = vmatprep.subr.mxu0 0.0
    %528 = vmatpush1.msra.mxu0 0.0
    %529 = vmatprep.subr.mxu0 0.0
    %530 = vmatpush1.msra.mxu0 0.0
    %531 = vmatprep.subr.mxu0 0.0
    %532 = vmatpush1.msra.mxu0 0.0
    %533 = vmatprep.subr.mxu0 0.0
    %534 = vmatpush1.msra.mxu0 0.0
    %535 = vmatprep.subr.mxu0 0.0
    %536 = vmatpush1.msra.mxu0 0.0
    %537 = vmatprep.subr.mxu0 0.0
    %538 = vmatpush1.msra.mxu0 0.0
    %539 = vmatprep.subr.mxu0 0.0
    %540 = vmatpush1.msra.mxu0 %v522
    %541 = vmatprep.subr.mxu0 0.0
    %542 = vmatpush1.msra.mxu0 %v521
    %543 = vmatprep.subr.mxu0 0.0
    %544 = vmatpush1.msra.mxu0 %v520
    %545 = vmatprep.subr.mxu0 0.0
    %546 = vmatpush1.msra.mxu0 %v519
    %547 = vmatprep.subr.mxu0 0.0
    %548 = vmatpush1.msra.mxu0 %v518
    %549 = vmatprep.subr.mxu0 0.0
    %550 = vmatpush1.msra.mxu0 %v517
    %551 = vmatprep.subr.mxu0 0.0
    %552 = vmatpush1.msra.mxu0 %v516
    %553 = vmatprep.subr.mxu0 0.0
    %554 = vmatpush1.msra.mxu0 %v515
    %555 = vmatprep.subr.mxu0 0.0
    %556 = vmatpush2.msra.mxu0 0.0
    %557 = vmatprep.subr.mxu0 0.0
    %558 = vmatpush2.msra.mxu0 0.0
    %559 = vmatprep.subr.mxu0 0.0
    %560 = vmatpush2.msra.mxu0 0.0
    %561 = vmatprep.subr.mxu0 0.0
    %562 = vmatpush2.msra.mxu0 0.0
    %563 = vmatprep.subr.mxu0 0.0
    %564 = vmatpush2.msra.mxu0 0.0
    %565 = vmatprep.subr.mxu0 0.0
    %566 = vmatpush2.msra.mxu0 0.0
    %567 = vmatprep.subr.mxu0 0.0
    %568 = vmatpush2.msra.mxu0 0.0
    %569 = vmatprep.subr.mxu0 0.0
    %570 = vmatpush2.msra.mxu0 0.0
    %571 = vmatprep.subr.mxu0 0.0
    %572 = vmatpush2.msra.mxu0 0.0
    %573 = vmatprep.subr.mxu0 0.0
    %574 = vmatpush2.msra.mxu0 0.0
    %575 = vmatprep.subr.mxu0 0.0
    %576 = vmatpush2.msra.mxu0 0.0
    %577 = vmatprep.subr.mxu0 0.0
    %578 = vmatpush2.msra.mxu0 0.0
    %579 = vmatprep.subr.mxu0 0.0
    %580 = vmatpush2.msra.mxu0 0.0
    %581 = vmatprep.subr.mxu0 0.0
    %582 = vmatpush2.msra.mxu0 0.0
    %583 = vmatprep.subr.mxu0 0.0
    %584 = vmatpush2.msra.mxu0 0.0
    %585 = vmatprep.subr.mxu0 0.0
    %586 = vmatpush2.msra.mxu0 0.0
    %587 = vmatprep.mubr.f32.mxu0 0.0
    %588 = vmatmul.mubr.f32.gmra.mxu0 %v134
    %v589 = vpop.f32.mrf.mxu0
    %v590 = vadd.f32 %v95, %v589
    %v591 = vpop.f32.mrf.mxu0
    %592 = vmatprep.mubr.f32.mxu0 0.0
    %593 = vmatmul.mubr.f32.gmra.mxu0 %v137
    %v594 = vpop.f32.mrf.mxu0
    %v595 = vadd.f32 %v100, %v594
    %v596 = vpop.f32.mrf.mxu0
    %597 = vmatprep.mubr.f32.mxu0 0.0
    %598 = vmatmul.mubr.f32.gmra.mxu0 %v140
    %v599 = vpop.f32.mrf.mxu0
    %v600 = vadd.f32 %v105, %v599
    %v601 = vpop.f32.mrf.mxu0
    %602 = vmatprep.mubr.f32.mxu0 0.0
    %603 = vmatmul.mubr.f32.gmra.mxu0 %v143
    %v604 = vpop.f32.mrf.mxu0
    %v605 = vadd.f32 %v110, %v604
    %v606 = vpop.f32.mrf.mxu0
    %607 = vmatprep.mubr.f32.mxu0 0.0
    %608 = vmatmul.mubr.f32.gmra.mxu0 %v146
    %v609 = vpop.f32.mrf.mxu0
    %v610 = vadd.f32 %v115, %v609
    %v611 = vpop.f32.mrf.mxu0
    %612 = vmatprep.mubr.f32.mxu0 0.0
    %613 = vmatmul.mubr.f32.gmra.mxu0 %v149
    %v614 = vpop.f32.mrf.mxu0
    %v615 = vadd.f32 %v120, %v614
    %v616 = vpop.f32.mrf.mxu0
    %617 = vmatprep.mubr.f32.mxu0 0.0
    %618 = vmatmul.mubr.f32.gmra.mxu0 %v152
    %v619 = vpop.f32.mrf.mxu0
    %v620 = vadd.f32 %v125, %v619
    %v621 = vpop.f32.mrf.mxu0
    %622 = vmatprep.mubr.f32.mxu0 0.0
    %623 = vmatmul.mubr.f32.gmra.mxu0 %v155
    %v624 = vpop.f32.mrf.mxu0
    %v625 = vadd.f32 %v130, %v624
    %v626 = vpop.f32.mrf.mxu0
    %627 = vdwg.mxu0
    %v628 = vmax.f32 %v590, 0.0
    %v629 = vmax.f32 %v595, 0.0
    %v630 = vmax.f32 %v600, 0.0
    %v631 = vmax.f32 %v605, 0.0
    %v632 = vmax.f32 %v610, 0.0
    %v633 = vmax.f32 %v615, 0.0
    %v634 = vmax.f32 %v620, 0.0
    %v635 = vmax.f32 %v625, 0.0
    %s636 = scalar_lea.vmem [#allocation3], 256
    %v637 = vld [vmem:[%s636] sm:$0xff]
    %v638 = vld [vmem:[%s636 + $0x8] sm:$0xff]
    %v639 = vld [vmem:[%s636 + $0x10] sm:$0xff]
    %v640 = vld [vmem:[%s636 + $0x18] sm:$0xff]
    %v641 = vld [vmem:[%s636 + $0x20] sm:$0xff]
    %v642 = vld [vmem:[%s636 + $0x28] sm:$0xff]
    %v643 = vld [vmem:[%s636 + $0x30] sm:$0xff]
    %v644 = vld [vmem:[%s636 + $0x38] sm:$0xff]
    %645 = vmatprep.subr.mxu0 0.0
    %646 = vmatpush1.msra.mxu0 0.0
    %647 = vmatprep.subr.mxu0 0.0
    %648 = vmatpush1.msra.mxu0 0.0
    %649 = vmatprep.subr.mxu0 0.0
    %650 = vmatpush1.msra.mxu0 0.0
    %651 = vmatprep.subr.mxu0 0.0
    %652 = vmatpush1.msra.mxu0 0.0
    %653 = vmatprep.subr.mxu0 0.0
    %654 = vmatpush1.msra.mxu0 0.0
    %655 = vmatprep.subr.mxu0 0.0
    %656 = vmatpush1.msra.mxu0 0.0
    %657 = vmatprep.subr.mxu0 0.0
    %658 = vmatpush1.msra.mxu0 0.0
    %659 = vmatprep.subr.mxu0 0.0
    %660 = vmatpush1.msra.mxu0 0.0
    %661 = vmatprep.subr.mxu0 0.0
    %662 = vmatpush1.msra.mxu0 %v644
    %663 = vmatprep.subr.mxu0 0.0
    %664 = vmatpush1.msra.mxu0 %v643
    %665 = vmatprep.subr.mxu0 0.0
    %666 = vmatpush1.msra.mxu0 %v642
    %667 = vmatprep.subr.mxu0 0.0
    %668 = vmatpush1.msra.mxu0 %v641
    %669 = vmatprep.subr.mxu0 0.0
    %670 = vmatpush1.msra.mxu0 %v640
    %671 = vmatprep.subr.mxu0 0.0
    %672 = vmatpush1.msra.mxu0 %v639
    %673 = vmatprep.subr.mxu0 0.0
    %674 = vmatpush1.msra.mxu0 %v638
    %675 = vmatprep.subr.mxu0 0.0
    %676 = vmatpush1.msra.mxu0 %v637
    %677 = vmatprep.subr.mxu0 0.0
    %678 = vmatpush2.msra.mxu0 0.0
    %679 = vmatprep.subr.mxu0 0.0
    %680 = vmatpush2.msra.mxu0 0.0
    %681 = vmatprep.subr.mxu0 0.0
    %682 = vmatpush2.msra.mxu0 0.0
    %683 = vmatprep.subr.mxu0 0.0
    %684 = vmatpush2.msra.mxu0 0.0
    %685 = vmatprep.subr.mxu0 0.0
    %686 = vmatpush2.msra.mxu0 0.0
    %687 = vmatprep.subr.mxu0 0.0
    %688 = vmatpush2.msra.mxu0 0.0
    %689 = vmatprep.subr.mxu0 0.0
    %690 = vmatpush2.msra.mxu0 0.0
    %691 = vmatprep.subr.mxu0 0.0
    %692 = vmatpush2.msra.mxu0 0.0
    %693 = vmatprep.subr.mxu0 0.0
    %694 = vmatpush2.msra.mxu0 0.0
    %695 = vmatprep.subr.mxu0 0.0
    %696 = vmatpush2.msra.mxu0 0.0
    %697 = vmatprep.subr.mxu0 0.0
    %698 = vmatpush2.msra.mxu0 0.0
    %699 = vmatprep.subr.mxu0 0.0
    %700 = vmatpush2.msra.mxu0 0.0
    %701 = vmatprep.subr.mxu0 0.0
    %702 = vmatpush2.msra.mxu0 0.0
    %703 = vmatprep.subr.mxu0 0.0
    %704 = vmatpush2.msra.mxu0 0.0
    %705 = vmatprep.subr.mxu0 0.0
    %706 = vmatpush2.msra.mxu0 0.0
    %707 = vmatprep.subr.mxu0 0.0
    %708 = vmatpush2.msra.mxu0 0.0
    %709 = vmatprep.mubr.f32.mxu0 0.0
    %710 = vmatmul.mubr.f32.gmra.mxu0 %v134
    %v711 = vpop.f32.mrf.mxu0
    %v712 = vadd.f32 %v95, %v711
    %v713 = vpop.f32.mrf.mxu0
    %714 = vmatprep.mubr.f32.mxu0 0.0
    %715 = vmatmul.mubr.f32.gmra.mxu0 %v137
    %v716 = vpop.f32.mrf.mxu0
    %v717 = vadd.f32 %v100, %v716
    %v718 = vpop.f32.mrf.mxu0
    %719 = vmatprep.mubr.f32.mxu0 0.0
    %720 = vmatmul.mubr.f32.gmra.mxu0 %v140
    %v721 = vpop.f32.mrf.mxu0
    %v722 = vadd.f32 %v105, %v721
    %v723 = vpop.f32.mrf.mxu0
    %724 = vmatprep.mubr.f32.mxu0 0.0
    %725 = vmatmul.mubr.f32.gmra.mxu0 %v143
    %v726 = vpop.f32.mrf.mxu0
    %v727 = vadd.f32 %v110, %v726
    %v728 = vpop.f32.mrf.mxu0
    %729 = vmatprep.mubr.f32.mxu0 0.0
    %730 = vmatmul.mubr.f32.gmra.mxu0 %v146
    %v731 = vpop.f32.mrf.mxu0
    %v732 = vadd.f32 %v115, %v731
    %v733 = vpop.f32.mrf.mxu0
    %734 = vmatprep.mubr.f32.mxu0 0.0
    %735 = vmatmul.mubr.f32.gmra.mxu0 %v149
    %v736 = vpop.f32.mrf.mxu0
    %v737 = vadd.f32 %v120, %v736
    %v738 = vpop.f32.mrf.mxu0
    %739 = vmatprep.mubr.f32.mxu0 0.0
    %740 = vmatmul.mubr.f32.gmra.mxu0 %v152
    %v741 = vpop.f32.mrf.mxu0
    %v742 = vadd.f32 %v125, %v741
    %v743 = vpop.f32.mrf.mxu0
    %744 = vmatprep.mubr.f32.mxu0 0.0
    %745 = vmatmul.mubr.f32.gmra.mxu0 %v155
    %v746 = vpop.f32.mrf.mxu0
    %v747 = vadd.f32 %v130, %v746
    %v748 = vpop.f32.mrf.mxu0
    %749 = vdwg.mxu0
    %v750 = vmax.f32 %v712, 0.0
    %v751 = vmax.f32 %v717, 0.0
    %v752 = vmax.f32 %v722, 0.0
    %v753 = vmax.f32 %v727, 0.0
    %v754 = vmax.f32 %v732, 0.0
    %v755 = vmax.f32 %v737, 0.0
    %v756 = vmax.f32 %v742, 0.0
    %v757 = vmax.f32 %v747, 0.0
    %v758 = vld [vmem:[#allocation6] sm:$0x1f]
    %v759 = vld [vmem:[#allocation6 + $0x8] sm:$0x1f]
    %v760 = vld [vmem:[#allocation6 + $0x10] sm:$0x1f]
    %v761 = vstv %s83
    %v763 = vsel %vm132, %v760, 0
    %765 = vmatprep.subr.mxu0 0.0
    %766 = vmatpush1.msra.mxu0 %v391
    %767 = vmatprep.subr.mxu0 0.0
    %768 = vmatpush1.msra.mxu0 %v390
    %769 = vmatprep.subr.mxu0 0.0
    %770 = vmatpush1.msra.mxu0 %v389
    %771 = vmatprep.subr.mxu0 0.0
    %772 = vmatpush1.msra.mxu0 %v388
    %773 = vmatprep.subr.mxu0 0.0
    %774 = vmatpush1.msra.mxu0 %v387
    %775 = vmatprep.subr.mxu0 0.0
    %776 = vmatpush1.msra.mxu0 %v386
    %777 = vmatprep.subr.mxu0 0.0
    %778 = vmatpush1.msra.mxu0 %v385
    %779 = vmatprep.subr.mxu0 0.0
    %780 = vmatpush1.msra.mxu0 %v384
    %781 = vmatprep.subr.mxu0 0.0
    %782 = vmatpush1.msra.mxu0 %v269
    %783 = vmatprep.subr.mxu0 0.0
    %784 = vmatpush1.msra.mxu0 %v268
    %785 = vmatprep.subr.mxu0 0.0
    %786 = vmatpush1.msra.mxu0 %v267
    %787 = vmatprep.subr.mxu0 0.0
    %788 = vmatpush1.msra.mxu0 %v266
    %789 = vmatprep.subr.mxu0 0.0
    %790 = vmatpush1.msra.mxu0 %v265
    %791 = vmatprep.subr.mxu0 0.0
    %792 = vmatpush1.msra.mxu0 %v264
    %793 = vmatprep.subr.mxu0 0.0
    %794 = vmatpush1.msra.mxu0 %v263
    %795 = vmatprep.subr.mxu0 0.0
    %796 = vmatpush1.msra.mxu0 %v262
    %797 = vmatprep.subr.mxu0 0.0
    %798 = vmatpush2.msra.mxu0 %v635
    %799 = vmatprep.subr.mxu0 0.0
    %800 = vmatpush2.msra.mxu0 %v634
    %801 = vmatprep.subr.mxu0 0.0
    %802 = vmatpush2.msra.mxu0 %v633
    %803 = vmatprep.subr.mxu0 0.0
    %804 = vmatpush2.msra.mxu0 %v632
    %805 = vmatprep.subr.mxu0 0.0
    %806 = vmatpush2.msra.mxu0 %v631
    %807 = vmatprep.subr.mxu0 0.0
    %808 = vmatpush2.msra.mxu0 %v630
    %809 = vmatprep.subr.mxu0 0.0
    %810 = vmatpush2.msra.mxu0 %v629
    %811 = vmatprep.subr.mxu0 0.0
    %812 = vmatpush2.msra.mxu0 %v628
    %813 = vmatprep.subr.mxu0 0.0
    %814 = vmatpush2.msra.mxu0 %v513
    %815 = vmatprep.subr.mxu0 0.0
    %816 = vmatpush2.msra.mxu0 %v512
    %817 = vmatprep.subr.mxu0 0.0
    %818 = vmatpush2.msra.mxu0 %v511
    %819 = vmatprep.subr.mxu0 0.0
    %820 = vmatpush2.msra.mxu0 %v510
    %821 = vmatprep.subr.mxu0 0.0
    %822 = vmatpush2.msra.mxu0 %v509
    %823 = vmatprep.subr.mxu0 0.0
    %824 = vmatpush2.msra.mxu0 %v508
    %825 = vmatprep.subr.mxu0 0.0
    %826 = vmatpush2.msra.mxu0 %v507
    %827 = vmatprep.subr.mxu0 0.0
    %828 = vmatpush2.msra.mxu0 %v506
    %829 = vmatprep.mubr.f32.mxu0 %v759
    %830 = vmatmul.mubr.f32.gmra.mxu0 %v758
    %v831 = vpop.f32.mrf.mxu0
    %v832 = vadd.f32 %v761, %v831
    %v833 = vpop.f32.mrf.mxu0
    %834 = vdwg.mxu0
    %835 = vmatprep.subr.mxu0 0.0
    %836 = vmatpush1.msra.mxu0 0.0
    %837 = vmatprep.subr.mxu0 0.0
    %838 = vmatpush1.msra.mxu0 0.0
    %839 = vmatprep.subr.mxu0 0.0
    %840 = vmatpush1.msra.mxu0 0.0
    %841 = vmatprep.subr.mxu0 0.0
    %842 = vmatpush1.msra.mxu0 0.0
    %843 = vmatprep.subr.mxu0 0.0
    %844 = vmatpush1.msra.mxu0 0.0
    %845 = vmatprep.subr.mxu0 0.0
    %846 = vmatpush1.msra.mxu0 0.0
    %847 = vmatprep.subr.mxu0 0.0
    %848 = vmatpush1.msra.mxu0 0.0
    %849 = vmatprep.subr.mxu0 0.0
    %850 = vmatpush1.msra.mxu0 0.0
    %851 = vmatprep.subr.mxu0 0.0
    %852 = vmatpush1.msra.mxu0 %v757
    %853 = vmatprep.subr.mxu0 0.0
    %854 = vmatpush1.msra.mxu0 %v756
    %855 = vmatprep.subr.mxu0 0.0
    %856 = vmatpush1.msra.mxu0 %v755
    %857 = vmatprep.subr.mxu0 0.0
    %858 = vmatpush1.msra.mxu0 %v754
    %859 = vmatprep.subr.mxu0 0.0
    %860 = vmatpush1.msra.mxu0 %v753
    %861 = vmatprep.subr.mxu0 0.0
    %862 = vmatpush1.msra.mxu0 %v752
    %863 = vmatprep.subr.mxu0 0.0
    %864 = vmatpush1.msra.mxu0 %v751
    %865 = vmatprep.subr.mxu0 0.0
    %866 = vmatpush1.msra.mxu0 %v750
    %867 = vmatprep.subr.mxu0 0.0
    %868 = vmatpush2.msra.mxu0 0.0
    %869 = vmatprep.subr.mxu0 0.0
    %870 = vmatpush2.msra.mxu0 0.0
    %871 = vmatprep.subr.mxu0 0.0
    %872 = vmatpush2.msra.mxu0 0.0
    %873 = vmatprep.subr.mxu0 0.0
    %874 = vmatpush2.msra.mxu0 0.0
    %875 = vmatprep.subr.mxu0 0.0
    %876 = vmatpush2.msra.mxu0 0.0
    %877 = vmatprep.subr.mxu0 0.0
    %878 = vmatpush2.msra.mxu0 0.0
    %879 = vmatprep.subr.mxu0 0.0
    %880 = vmatpush2.msra.mxu0 0.0
    %881 = vmatprep.subr.mxu0 0.0
    %882 = vmatpush2.msra.mxu0 0.0
    %883 = vmatprep.subr.mxu0 0.0
    %884 = vmatpush2.msra.mxu0 0.0
    %885 = vmatprep.subr.mxu0 0.0
    %886 = vmatpush2.msra.mxu0 0.0
    %887 = vmatprep.subr.mxu0 0.0
    %888 = vmatpush2.msra.mxu0 0.0
    %889 = vmatprep.subr.mxu0 0.0
    %890 = vmatpush2.msra.mxu0 0.0
    %891 = vmatprep.subr.mxu0 0.0
    %892 = vmatpush2.msra.mxu0 0.0
    %893 = vmatprep.subr.mxu0 0.0
    %894 = vmatpush2.msra.mxu0 0.0
    %895 = vmatprep.subr.mxu0 0.0
    %896 = vmatpush2.msra.mxu0 0.0
    %897 = vmatprep.subr.mxu0 0.0
    %898 = vmatpush2.msra.mxu0 0.0
    %899 = vmatprep.mubr.f32.mxu0 0.0
    %900 = vmatmul.mubr.f32.gmra.mxu0 %v763
    %v901 = vpop.f32.mrf.mxu0
    %v902 = vadd.f32 %v832, %v901
    %v903 = vpop.f32.mrf.mxu0
    %904 = vdwg.mxu0
    %v905 = vmax.f32 %v902, 0.0
    %v906 = vld [vmem:[#allocation8] sm:$0xff]
    %v907 = vld [vmem:[#allocation8 + $0x8] sm:$0xff]
    %v908 = vld [vmem:[#allocation8 + $0x10] sm:$0xff]
    %v909 = vld [vmem:[#allocation8 + $0x18] sm:$0xff]
    %v910 = vld [vmem:[#allocation8 + $0x20] sm:$0xff]
    %v911 = vld [vmem:[#allocation8 + $0x28] sm:$0xff]
    %v912 = vld [vmem:[#allocation8 + $0x30] sm:$0xff]
    %v913 = vld [vmem:[#allocation8 + $0x38] sm:$0xff]
    %v914 = vld [vmem:[#allocation8 + $0x40] sm:$0xff]
    %v915 = vld [vmem:[#allocation8 + $0x48] sm:$0xff]
    %v916 = vld [vmem:[#allocation8 + $0x50] sm:$0xff]
    %v917 = vld [vmem:[#allocation8 + $0x58] sm:$0xff]
    %v918 = vld [vmem:[#allocation8 + $0x60] sm:$0xff]
    %v919 = vld [vmem:[#allocation8 + $0x68] sm:$0xff]
    %v920 = vld [vmem:[#allocation8 + $0x70] sm:$0xff]
    %v921 = vld [vmem:[#allocation8 + $0x78] sm:$0xff]
    %v922 = vld [vmem:[#allocation8 + $0x80] sm:$0xff]
    %v923 = vld [vmem:[#allocation8 + $0x88] sm:$0xff]
    %v924 = vld [vmem:[#allocation8 + $0x90] sm:$0xff]
    %v925 = vld [vmem:[#allocation8 + $0x98] sm:$0xff]
    %v926 = vld [vmem:[#allocation8 + $0xa0] sm:$0xff]
    %v927 = vld [vmem:[#allocation8 + $0xa8] sm:$0xff]
    %v928 = vld [vmem:[#allocation8 + $0xb0] sm:$0xff]
    %v929 = vld [vmem:[#allocation8 + $0xb8] sm:$0xff]
    %930 = vset.pattern.permute.xlu0 1
    %931 = vperm.xlu0 %930, %v75
    %v932 = vpop.permute.xlu0 %931
    %934 = vset.pattern.permute.xlu0 1
    %935 = vperm.xlu0 %934, %v76
    %v936 = vpop.permute.xlu0 %935
    %938 = vset.pattern.permute.xlu0 1
    %939 = vperm.xlu0 %938, %v77
    %v940 = vpop.permute.xlu0 %939
    %942 = vset.pattern.permute.xlu0 1
    %943 = vperm.xlu0 %942, %v78
    %v944 = vpop.permute.xlu0 %943
    %946 = vset.pattern.permute.xlu0 1
    %947 = vperm.xlu0 %946, %v79
    %v948 = vpop.permute.xlu0 %947
    %950 = vset.pattern.permute.xlu0 1
    %951 = vperm.xlu0 %950, %v80
    %v952 = vpop.permute.xlu0 %951
    %954 = vset.pattern.permute.xlu0 1
    %955 = vperm.xlu0 %954, %v81
    %v956 = vpop.permute.xlu0 %955
    %958 = vset.pattern.permute.xlu0 1
    %959 = vperm.xlu0 %958, %v82
    %v960 = vpop.permute.xlu0 %959
    %v963 = vsel %vm132, %v908, 0
    %v966 = vsel %vm132, %v911, 0
    %v969 = vsel %vm132, %v914, 0
    %v972 = vsel %vm132, %v917, 0
    %v975 = vsel %vm132, %v920, 0
    %v978 = vsel %vm132, %v923, 0
    %v981 = vsel %vm132, %v926, 0
    %v984 = vsel %vm132, %v929, 0
    %986 = vmatprep.subr.mxu0 0.0
    %987 = vmatpush1.msra.mxu0 %v391
    %988 = vmatprep.subr.mxu0 0.0
    %989 = vmatpush1.msra.mxu0 %v390
    %990 = vmatprep.subr.mxu0 0.0
    %991 = vmatpush1.msra.mxu0 %v389
    %992 = vmatprep.subr.mxu0 0.0
    %993 = vmatpush1.msra.mxu0 %v388
    %994 = vmatprep.subr.mxu0 0.0
    %995 = vmatpush1.msra.mxu0 %v387
    %996 = vmatprep.subr.mxu0 0.0
    %997 = vmatpush1.msra.mxu0 %v386
    %998 = vmatprep.subr.mxu0 0.0
    %999 = vmatpush1.msra.mxu0 %v385
    %1000 = vmatprep.subr.mxu0 0.0
    %1001 = vmatpush1.msra.mxu0 %v384
    %1002 = vmatprep.subr.mxu0 0.0
    %1003 = vmatpush1.msra.mxu0 %v269
    %1004 = vmatprep.subr.mxu0 0.0
    %1005 = vmatpush1.msra.mxu0 %v268
    %1006 = vmatprep.subr.mxu0 0.0
    %1007 = vmatpush1.msra.mxu0 %v267
    %1008 = vmatprep.subr.mxu0 0.0
    %1009 = vmatpush1.msra.mxu0 %v266
    %1010 = vmatprep.subr.mxu0 0.0
    %1011 = vmatpush1.msra.mxu0 %v265
    %1012 = vmatprep.subr.mxu0 0.0
    %1013 = vmatpush1.msra.mxu0 %v264
    %1014 = vmatprep.subr.mxu0 0.0
    %1015 = vmatpush1.msra.mxu0 %v263
    %1016 = vmatprep.subr.mxu0 0.0
    %1017 = vmatpush1.msra.mxu0 %v262
    %1018 = vmatprep.subr.mxu0 0.0
    %1019 = vmatpush2.msra.mxu0 %v635
    %1020 = vmatprep.subr.mxu0 0.0
    %1021 = vmatpush2.msra.mxu0 %v634
    %1022 = vmatprep.subr.mxu0 0.0
    %1023 = vmatpush2.msra.mxu0 %v633
    %1024 = vmatprep.subr.mxu0 0.0
    %1025 = vmatpush2.msra.mxu0 %v632
    %1026 = vmatprep.subr.mxu0 0.0
    %1027 = vmatpush2.msra.mxu0 %v631
    %1028 = vmatprep.subr.mxu0 0.0
    %1029 = vmatpush2.msra.mxu0 %v630
    %1030 = vmatprep.subr.mxu0 0.0
    %1031 = vmatpush2.msra.mxu0 %v629
    %1032 = vmatprep.subr.mxu0 0.0
    %1033 = vmatpush2.msra.mxu0 %v628
    %1034 = vmatprep.subr.mxu0 0.0
    %1035 = vmatpush2.msra.mxu0 %v513
    %1036 = vmatprep.subr.mxu0 0.0
    %1037 = vmatpush2.msra.mxu0 %v512
    %1038 = vmatprep.subr.mxu0 0.0
    %1039 = vmatpush2.msra.mxu0 %v511
    %1040 = vmatprep.subr.mxu0 0.0
    %1041 = vmatpush2.msra.mxu0 %v510
    %1042 = vmatprep.subr.mxu0 0.0
    %1043 = vmatpush2.msra.mxu0 %v509
    %1044 = vmatprep.subr.mxu0 0.0
    %1045 = vmatpush2.msra.mxu0 %v508
    %1046 = vmatprep.subr.mxu0 0.0
    %1047 = vmatpush2.msra.mxu0 %v507
    %1048 = vmatprep.subr.mxu0 0.0
    %1049 = vmatpush2.msra.mxu0 %v506
    %1050 = vmatprep.mubr.f32.mxu0 %v907
    %1051 = vmatmul.mubr.f32.gmra.mxu0 %v906
    %v1052 = vpop.f32.mrf.mxu0
    %v1053 = vadd.f32 %v932, %v1052
    %v1054 = vpop.f32.mrf.mxu0
    %1055 = vmatprep.mubr.f32.mxu0 %v910
    %1056 = vmatmul.mubr.f32.gmra.mxu0 %v909
    %v1057 = vpop.f32.mrf.mxu0
    %v1058 = vadd.f32 %v936, %v1057
    %v1059 = vpop.f32.mrf.mxu0
    %1060 = vmatprep.mubr.f32.mxu0 %v913
    %1061 = vmatmul.mubr.f32.gmra.mxu0 %v912
    %v1062 = vpop.f32.mrf.mxu0
    %v1063 = vadd.f32 %v940, %v1062
    %v1064 = vpop.f32.mrf.mxu0
    %1065 = vmatprep.mubr.f32.mxu0 %v916
    %1066 = vmatmul.mubr.f32.gmra.mxu0 %v915
    %v1067 = vpop.f32.mrf.mxu0
    %v1068 = vadd.f32 %v944, %v1067
    %v1069 = vpop.f32.mrf.mxu0
    %1070 = vmatprep.mubr.f32.mxu0 %v919
    %1071 = vmatmul.mubr.f32.gmra.mxu0 %v918
    %v1072 = vpop.f32.mrf.mxu0
    %v1073 = vadd.f32 %v948, %v1072
    %v1074 = vpop.f32.mrf.mxu0
    %1075 = vmatprep.mubr.f32.mxu0 %v922
    %1076 = vmatmul.mubr.f32.gmra.mxu0 %v921
    %v1077 = vpop.f32.mrf.mxu0
    %v1078 = vadd.f32 %v952, %v1077
    %v1079 = vpop.f32.mrf.mxu0
    %1080 = vmatprep.mubr.f32.mxu0 %v925
    %1081 = vmatmul.mubr.f32.gmra.mxu0 %v924
    %v1082 = vpop.f32.mrf.mxu0
    %v1083 = vadd.f32 %v956, %v1082
    %v1084 = vpop.f32.mrf.mxu0
    %1085 = vmatprep.mubr.f32.mxu0 %v928
    %1086 = vmatmul.mubr.f32.gmra.mxu0 %v927
    %v1087 = vpop.f32.mrf.mxu0
    %v1088 = vadd.f32 %v960, %v1087
    %v1089 = vpop.f32.mrf.mxu0
    %1090 = vdwg.mxu0
    %1091 = vmatprep.subr.mxu0 0.0
    %1092 = vmatpush1.msra.mxu0 0.0
    %1093 = vmatprep.subr.mxu0 0.0
    %1094 = vmatpush1.msra.mxu0 0.0
    %1095 = vmatprep.subr.mxu0 0.0
    %1096 = vmatpush1.msra.mxu0 0.0
    %1097 = vmatprep.subr.mxu0 0.0
    %1098 = vmatpush1.msra.mxu0 0.0
    %1099 = vmatprep.subr.mxu0 0.0
    %1100 = vmatpush1.msra.mxu0 0.0
    %1101 = vmatprep.subr.mxu0 0.0
    %1102 = vmatpush1.msra.mxu0 0.0
    %1103 = vmatprep.subr.mxu0 0.0
    %1104 = vmatpush1.msra.mxu0 0.0
    %1105 = vmatprep.subr.mxu0 0.0
    %1106 = vmatpush1.msra.mxu0 0.0
    %1107 = vmatprep.subr.mxu0 0.0
    %1108 = vmatpush1.msra.mxu0 %v757
    %1109 = vmatprep.subr.mxu0 0.0
    %1110 = vmatpush1.msra.mxu0 %v756
    %1111 = vmatprep.subr.mxu0 0.0
    %1112 = vmatpush1.msra.mxu0 %v755
    %1113 = vmatprep.subr.mxu0 0.0
    %1114 = vmatpush1.msra.mxu0 %v754
    %1115 = vmatprep.subr.mxu0 0.0
    %1116 = vmatpush1.msra.mxu0 %v753
    %1117 = vmatprep.subr.mxu0 0.0
    %1118 = vmatpush1.msra.mxu0 %v752
    %1119 = vmatprep.subr.mxu0 0.0
    %1120 = vmatpush1.msra.mxu0 %v751
    %1121 = vmatprep.subr.mxu0 0.0
    %1122 = vmatpush1.msra.mxu0 %v750
    %1123 = vmatprep.subr.mxu0 0.0
    %1124 = vmatpush2.msra.mxu0 0.0
    %1125 = vmatprep.subr.mxu0 0.0
    %1126 = vmatpush2.msra.mxu0 0.0
    %1127 = vmatprep.subr.mxu0 0.0
    %1128 = vmatpush2.msra.mxu0 0.0
    %1129 = vmatprep.subr.mxu0 0.0
    %1130 = vmatpush2.msra.mxu0 0.0
    %1131 = vmatprep.subr.mxu0 0.0
    %1132 = vmatpush2.msra.mxu0 0.0
    %1133 = vmatprep.subr.mxu0 0.0
    %1134 = vmatpush2.msra.mxu0 0.0
    %1135 = vmatprep.subr.mxu0 0.0
    %1136 = vmatpush2.msra.mxu0 0.0
    %1137 = vmatprep.subr.mxu0 0.0
    %1138 = vmatpush2.msra.mxu0 0.0
    %1139 = vmatprep.subr.mxu0 0.0
    %1140 = vmatpush2.msra.mxu0 0.0
    %1141 = vmatprep.subr.mxu0 0.0
    %1142 = vmatpush2.msra.mxu0 0.0
    %1143 = vmatprep.subr.mxu0 0.0
    %1144 = vmatpush2.msra.mxu0 0.0
    %1145 = vmatprep.subr.mxu0 0.0
    %1146 = vmatpush2.msra.mxu0 0.0
    %1147 = vmatprep.subr.mxu0 0.0
    %1148 = vmatpush2.msra.mxu0 0.0
    %1149 = vmatprep.subr.mxu0 0.0
    %1150 = vmatpush2.msra.mxu0 0.0
    %1151 = vmatprep.subr.mxu0 0.0
    %1152 = vmatpush2.msra.mxu0 0.0
    %1153 = vmatprep.subr.mxu0 0.0
    %1154 = vmatpush2.msra.mxu0 0.0
    %1155 = vmatprep.mubr.f32.mxu0 0.0
    %1156 = vmatmul.mubr.f32.gmra.mxu0 %v963
    %v1157 = vpop.f32.mrf.mxu0
    %v1158 = vadd.f32 %v1053, %v1157
    %v1159 = vpop.f32.mrf.mxu0
    %1160 = vmatprep.mubr.f32.mxu0 0.0
    %1161 = vmatmul.mubr.f32.gmra.mxu0 %v966
    %v1162 = vpop.f32.mrf.mxu0
    %v1163 = vadd.f32 %v1058, %v1162
    %v1164 = vpop.f32.mrf.mxu0
    %1165 = vmatprep.mubr.f32.mxu0 0.0
    %1166 = vmatmul.mubr.f32.gmra.mxu0 %v969
    %v1167 = vpop.f32.mrf.mxu0
    %v1168 = vadd.f32 %v1063, %v1167
    %v1169 = vpop.f32.mrf.mxu0
    %1170 = vmatprep.mubr.f32.mxu0 0.0
    %1171 = vmatmul.mubr.f32.gmra.mxu0 %v972
    %v1172 = vpop.f32.mrf.mxu0
    %v1173 = vadd.f32 %v1068, %v1172
    %v1174 = vpop.f32.mrf.mxu0
    %1175 = vmatprep.mubr.f32.mxu0 0.0
    %1176 = vmatmul.mubr.f32.gmra.mxu0 %v975
    %v1177 = vpop.f32.mrf.mxu0
    %v1178 = vadd.f32 %v1073, %v1177
    %v1179 = vpop.f32.mrf.mxu0
    %1180 = vmatprep.mubr.f32.mxu0 0.0
    %1181 = vmatmul.mubr.f32.gmra.mxu0 %v978
    %v1182 = vpop.f32.mrf.mxu0
    %v1183 = vadd.f32 %v1078, %v1182
    %v1184 = vpop.f32.mrf.mxu0
    %1185 = vmatprep.mubr.f32.mxu0 0.0
    %1186 = vmatmul.mubr.f32.gmra.mxu0 %v981
    %v1187 = vpop.f32.mrf.mxu0
    %v1188 = vadd.f32 %v1083, %v1187
    %v1189 = vpop.f32.mrf.mxu0
    %1190 = vmatprep.mubr.f32.mxu0 0.0
    %1191 = vmatmul.mubr.f32.gmra.mxu0 %v984
    %v1192 = vpop.f32.mrf.mxu0
    %v1193 = vadd.f32 %v1088, %v1192
    %v1194 = vpop.f32.mrf.mxu0
    %1195 = vdwg.mxu0
    %v1196 = vmax.f32 %v1158, 0.0
    %v1197 = vmax.f32 %v1163, 0.0
    %v1198 = vmax.f32 %v1168, 0.0
    %v1199 = vmax.f32 %v1173, 0.0
    %v1200 = vmax.f32 %v1178, 0.0
    %v1201 = vmax.f32 %v1183, 0.0
    %v1202 = vmax.f32 %v1188, 0.0
    %v1203 = vmax.f32 %v1193, 0.0
    %v1204 = vmul.f32 %v262, %v1196
    %v1205 = vmul.f32 %v263, %v1197
    %v1206 = vmul.f32 %v264, %v1198
    %v1207 = vmul.f32 %v265, %v1199
    %v1208 = vmul.f32 %v266, %v1200
    %v1209 = vmul.f32 %v267, %v1201
    %v1210 = vmul.f32 %v268, %v1202
    %v1211 = vmul.f32 %v269, %v1203
    %v1212 = vlaneseq
    %v1213 = vshrl.u32 %v1212, 7
    %v1214 = vsub.s32 0, %v1213
    %v1215 = vrot.slane %v905, %v1214
    %v1216 = vmul.f32 %v1204, %v1215
    %v1217 = vmul.f32 %v1205, %v1215
    %v1218 = vmul.f32 %v1206, %v1215
    %v1219 = vmul.f32 %v1207, %v1215
    %v1220 = vmul.f32 %v1208, %v1215
    %v1221 = vmul.f32 %v1209, %v1215
    %v1222 = vmul.f32 %v1210, %v1215
    %v1223 = vmul.f32 %v1211, %v1215
    %v1224 = vmul.f32 %v384, %v1196
    %v1225 = vmul.f32 %v385, %v1197
    %v1226 = vmul.f32 %v386, %v1198
    %v1227 = vmul.f32 %v387, %v1199
    %v1228 = vmul.f32 %v388, %v1200
    %v1229 = vmul.f32 %v389, %v1201
    %v1230 = vmul.f32 %v390, %v1202
    %v1231 = vmul.f32 %v391, %v1203
    %v1232 = vlaneseq
    %v1233 = vshrl.u32 %v1232, 7
    %v1234 = vsub.s32 1, %v1233
    %v1235 = vrot.slane %v905, %v1234
    %v1236 = vmul.f32 %v1224, %v1235
    %v1237 = vmul.f32 %v1225, %v1235
    %v1238 = vmul.f32 %v1226, %v1235
    %v1239 = vmul.f32 %v1227, %v1235
    %v1240 = vmul.f32 %v1228, %v1235
    %v1241 = vmul.f32 %v1229, %v1235
    %v1242 = vmul.f32 %v1230, %v1235
    %v1243 = vmul.f32 %v1231, %v1235
    %v1244 = vmul.f32 %v506, %v1196
    %v1245 = vmul.f32 %v507, %v1197
    %v1246 = vmul.f32 %v508, %v1198
    %v1247 = vmul.f32 %v509, %v1199
    %v1248 = vmul.f32 %v510, %v1200
    %v1249 = vmul.f32 %v511, %v1201
    %v1250 = vmul.f32 %v512, %v1202
    %v1251 = vmul.f32 %v513, %v1203
    %v1252 = vlaneseq
    %v1253 = vshrl.u32 %v1252, 7
    %v1254 = vsub.s32 2, %v1253
    %v1255 = vrot.slane %v905, %v1254
    %v1256 = vmul.f32 %v1244, %v1255
    %v1257 = vmul.f32 %v1245, %v1255
    %v1258 = vmul.f32 %v1246, %v1255
    %v1259 = vmul.f32 %v1247, %v1255
    %v1260 = vmul.f32 %v1248, %v1255
    %v1261 = vmul.f32 %v1249, %v1255
    %v1262 = vmul.f32 %v1250, %v1255
    %v1263 = vmul.f32 %v1251, %v1255
    %v1264 = vmul.f32 %v628, %v1196
    %v1265 = vmul.f32 %v629, %v1197
    %v1266 = vmul.f32 %v630, %v1198
    %v1267 = vmul.f32 %v631, %v1199
    %v1268 = vmul.f32 %v632, %v1200
    %v1269 = vmul.f32 %v633, %v1201
    %v1270 = vmul.f32 %v634, %v1202
    %v1271 = vmul.f32 %v635, %v1203
    %v1272 = vlaneseq
    %v1273 = vshrl.u32 %v1272, 7
    %v1274 = vsub.s32 3, %v1273
    %v1275 = vrot.slane %v905, %v1274
    %v1276 = vmul.f32 %v1264, %v1275
    %v1277 = vmul.f32 %v1265, %v1275
    %v1278 = vmul.f32 %v1266, %v1275
    %v1279 = vmul.f32 %v1267, %v1275
    %v1280 = vmul.f32 %v1268, %v1275
    %v1281 = vmul.f32 %v1269, %v1275
    %v1282 = vmul.f32 %v1270, %v1275
    %v1283 = vmul.f32 %v1271, %v1275
    %v1284 = vmul.f32 %v750, %v1196
    %v1285 = vmul.f32 %v751, %v1197
    %v1286 = vmul.f32 %v752, %v1198
    %v1287 = vmul.f32 %v753, %v1199
    %v1288 = vmul.f32 %v754, %v1200
    %v1289 = vmul.f32 %v755, %v1201
    %v1290 = vmul.f32 %v756, %v1202
    %v1291 = vmul.f32 %v757, %v1203
    %v1292 = vlaneseq
    %v1293 = vshrl.u32 %v1292, 7
    %v1294 = vsub.s32 4, %v1293
    %v1295 = vrot.slane %v905, %v1294
    %v1296 = vmul.f32 %v1284, %v1295
    %v1297 = vmul.f32 %v1285, %v1295
    %v1298 = vmul.f32 %v1286, %v1295
    %v1299 = vmul.f32 %v1287, %v1295
    %v1300 = vmul.f32 %v1288, %v1295
    %v1301 = vmul.f32 %v1289, %v1295
    %v1302 = vmul.f32 %v1290, %v1295
    %v1303 = vmul.f32 %v1291, %v1295
    %v1304 = vld [vmem:[%s4] sm:$0xff]
    %v1305 = vld [vmem:[%s4 + $0x8] sm:$0xf]
    %1306 = vset.pattern.permute.xlu0 2
    %1307 = vperm.xlu0 %1306, %v75
    %v1308 = vpop.permute.xlu0 %1307
    %v1312 = vcombine.high %v1304, %v1304
    %v1314 = vsel %vm132, %v1305, 0
    %1316 = vmatprep.subr.mxu0 0.0
    %1317 = vmatpush1.msra.mxu0 %v1243
    %1318 = vmatprep.subr.mxu0 0.0
    %1319 = vmatpush1.msra.mxu0 %v1242
    %1320 = vmatprep.subr.mxu0 0.0
    %1321 = vmatpush1.msra.mxu0 %v1241
    %1322 = vmatprep.subr.mxu0 0.0
    %1323 = vmatpush1.msra.mxu0 %v1240
    %1324 = vmatprep.subr.mxu0 0.0
    %1325 = vmatpush1.msra.mxu0 %v1239
    %1326 = vmatprep.subr.mxu0 0.0
    %1327 = vmatpush1.msra.mxu0 %v1238
    %1328 = vmatprep.subr.mxu0 0.0
    %1329 = vmatpush1.msra.mxu0 %v1237
    %1330 = vmatprep.subr.mxu0 0.0
    %1331 = vmatpush1.msra.mxu0 %v1236
    %1332 = vmatprep.subr.mxu0 0.0
    %1333 = vmatpush1.msra.mxu0 %v1223
    %1334 = vmatprep.subr.mxu0 0.0
    %1335 = vmatpush1.msra.mxu0 %v1222
    %1336 = vmatprep.subr.mxu0 0.0
    %1337 = vmatpush1.msra.mxu0 %v1221
    %1338 = vmatprep.subr.mxu0 0.0
    %1339 = vmatpush1.msra.mxu0 %v1220
    %1340 = vmatprep.subr.mxu0 0.0
    %1341 = vmatpush1.msra.mxu0 %v1219
    %1342 = vmatprep.subr.mxu0 0.0
    %1343 = vmatpush1.msra.mxu0 %v1218
    %1344 = vmatprep.subr.mxu0 0.0
    %1345 = vmatpush1.msra.mxu0 %v1217
    %1346 = vmatprep.subr.mxu0 0.0
    %1347 = vmatpush1.msra.mxu0 %v1216
    %1348 = vmatprep.subr.mxu0 0.0
    %1349 = vmatpush2.msra.mxu0 %v1283
    %1350 = vmatprep.subr.mxu0 0.0
    %1351 = vmatpush2.msra.mxu0 %v1282
    %1352 = vmatprep.subr.mxu0 0.0
    %1353 = vmatpush2.msra.mxu0 %v1281
    %1354 = vmatprep.subr.mxu0 0.0
    %1355 = vmatpush2.msra.mxu0 %v1280
    %1356 = vmatprep.subr.mxu0 0.0
    %1357 = vmatpush2.msra.mxu0 %v1279
    %1358 = vmatprep.subr.mxu0 0.0
    %1359 = vmatpush2.msra.mxu0 %v1278
    %1360 = vmatprep.subr.mxu0 0.0
    %1361 = vmatpush2.msra.mxu0 %v1277
    %1362 = vmatprep.subr.mxu0 0.0
    %1363 = vmatpush2.msra.mxu0 %v1276
    %1364 = vmatprep.subr.mxu0 0.0
    %1365 = vmatpush2.msra.mxu0 %v1263
    %1366 = vmatprep.subr.mxu0 0.0
    %1367 = vmatpush2.msra.mxu0 %v1262
    %1368 = vmatprep.subr.mxu0 0.0
    %1369 = vmatpush2.msra.mxu0 %v1261
    %1370 = vmatprep.subr.mxu0 0.0
    %1371 = vmatpush2.msra.mxu0 %v1260
    %1372 = vmatprep.subr.mxu0 0.0
    %1373 = vmatpush2.msra.mxu0 %v1259
    %1374 = vmatprep.subr.mxu0 0.0
    %1375 = vmatpush2.msra.mxu0 %v1258
    %1376 = vmatprep.subr.mxu0 0.0
    %1377 = vmatpush2.msra.mxu0 %v1257
    %1378 = vmatprep.subr.mxu0 0.0
    %1379 = vmatpush2.msra.mxu0 %v1256
    %1380 = vmatprep.mubr.f32.mxu0 %v1312
    %1381 = vmatmul.mubr.f32.gmra.mxu0 %v1304
    %v1382 = vpop.f32.mrf.mxu0
    %v1383 = vadd.f32 %v1308, %v1382
    %v1384 = vpop.f32.mrf.mxu0
    %1385 = vdwg.mxu0
    %1386 = vmatprep.subr.mxu0 0.0
    %1387 = vmatpush1.msra.mxu0 0.0
    %1388 = vmatprep.subr.mxu0 0.0
    %1389 = vmatpush1.msra.mxu0 0.0
    %1390 = vmatprep.subr.mxu0 0.0
    %1391 = vmatpush1.msra.mxu0 0.0
    %1392 = vmatprep.subr.mxu0 0.0
    %1393 = vmatpush1.msra.mxu0 0.0
    %1394 = vmatprep.subr.mxu0 0.0
    %1395 = vmatpush1.msra.mxu0 0.0
    %1396 = vmatprep.subr.mxu0 0.0
    %1397 = vmatpush1.msra.mxu0 0.0
    %1398 = vmatprep.subr.mxu0 0.0
    %1399 = vmatpush1.msra.mxu0 0.0
    %1400 = vmatprep.subr.mxu0 0.0
    %1401 = vmatpush1.msra.mxu0 0.0
    %1402 = vmatprep.subr.mxu0 0.0
    %1403 = vmatpush1.msra.mxu0 %v1303
    %1404 = vmatprep.subr.mxu0 0.0
    %1405 = vmatpush1.msra.mxu0 %v1302
    %1406 = vmatprep.subr.mxu0 0.0
    %1407 = vmatpush1.msra.mxu0 %v1301
    %1408 = vmatprep.subr.mxu0 0.0
    %1409 = vmatpush1.msra.mxu0 %v1300
    %1410 = vmatprep.subr.mxu0 0.0
    %1411 = vmatpush1.msra.mxu0 %v1299
    %1412 = vmatprep.subr.mxu0 0.0
    %1413 = vmatpush1.msra.mxu0 %v1298
    %1414 = vmatprep.subr.mxu0 0.0
    %1415 = vmatpush1.msra.mxu0 %v1297
    %1416 = vmatprep.subr.mxu0 0.0
    %1417 = vmatpush1.msra.mxu0 %v1296
    %1418 = vmatprep.subr.mxu0 0.0
    %1419 = vmatpush2.msra.mxu0 0.0
    %1420 = vmatprep.subr.mxu0 0.0
    %1421 = vmatpush2.msra.mxu0 0.0
    %1422 = vmatprep.subr.mxu0 0.0
    %1423 = vmatpush2.msra.mxu0 0.0
    %1424 = vmatprep.subr.mxu0 0.0
    %1425 = vmatpush2.msra.mxu0 0.0
    %1426 = vmatprep.subr.mxu0 0.0
    %1427 = vmatpush2.msra.mxu0 0.0
    %1428 = vmatprep.subr.mxu0 0.0
    %1429 = vmatpush2.msra.mxu0 0.0
    %1430 = vmatprep.subr.mxu0 0.0
    %1431 = vmatpush2.msra.mxu0 0.0
    %1432 = vmatprep.subr.mxu0 0.0
    %1433 = vmatpush2.msra.mxu0 0.0
    %1434 = vmatprep.subr.mxu0 0.0
    %1435 = vmatpush2.msra.mxu0 0.0
    %1436 = vmatprep.subr.mxu0 0.0
    %1437 = vmatpush2.msra.mxu0 0.0
    %1438 = vmatprep.subr.mxu0 0.0
    %1439 = vmatpush2.msra.mxu0 0.0
    %1440 = vmatprep.subr.mxu0 0.0
    %1441 = vmatpush2.msra.mxu0 0.0
    %1442 = vmatprep.subr.mxu0 0.0
    %1443 = vmatpush2.msra.mxu0 0.0
    %1444 = vmatprep.subr.mxu0 0.0
    %1445 = vmatpush2.msra.mxu0 0.0
    %1446 = vmatprep.subr.mxu0 0.0
    %1447 = vmatpush2.msra.mxu0 0.0
    %1448 = vmatprep.subr.mxu0 0.0
    %1449 = vmatpush2.msra.mxu0 0.0
    %1450 = vmatprep.mubr.f32.mxu0 0.0
    %1451 = vmatmul.mubr.f32.gmra.mxu0 %v1314
    %v1452 = vpop.f32.mrf.mxu0
    %v1453 = vadd.f32 %v1383, %v1452
    %v1454 = vpop.f32.mrf.mxu0
    %1455 = vdwg.mxu0
    %v1456 = vmax.f32 %v1453, 0.0
    %1457 = vst [vmem:[#allocation9] sm:$0xf] %v1456
    // Predicated region
    $region42: #{tpu_custom_call.1} parent=1 // pred_check
      _
    $region43: #{tpu_custom_call.1} parent=1 // pred_check_branch
      %1459 = sbr.rel (0) target = $region45
    $region44: #{tpu_custom_call.1} parent=1 // pred_region
      %s1461 = ssub.s32 64, 64
      %1462 = vsyncadd [#allocation5], %s1461
      %s1464 = sshll.u32 [#allocation9], 4
      %s1465 = int_to_ptr.vmem [resolvable:$true] %s1464
      %1467 = dma.vmem_to_hbm [thread:$0]  %s1465, 64, %s7, [#allocation5]
    $region45: #{tpu_custom_call.1} parent=1 // pred_fallthru
      _
    // Predicated region
    $region46: #{tpu_custom_call.1} parent=1 // pred_check
      _
    $region47: #{tpu_custom_call.1} parent=1 // pred_check_branch
      %1469 = sbr.rel (0) target = $region49
    $region48: #{tpu_custom_call.1} parent=1 // pred_region
      %1470 = dma.done [#allocation5], 64
    $region49: #{tpu_custom_call.1} parent=1 // pred_fallthru
      _
    %1471 = vsyncpa [#allocation4], 1
    %1472 = vsyncpa [#allocation7], 1
    %1473 = vsyncpa [#allocation5], 1

</llo_original>
